<compile_context>
chip_gen: v7x
topology: tpu7x:2x2x1
jax: 0.10.0
libtpu: 0.0.40
codegen_flags: <defaults>
</compile_context>

<pallas_src>
import jax
import jax.numpy as jnp
from jax.experimental import pallas as pl
from jax.experimental.pallas import tpu as pltpu

LN_EPS = 1e-5

# True (PyTorch) feature dims and lane-padded dims.
D0, D1, D2, D3 = 968, 500, 100, 8
D0P, D1P, D2P, D3P = 1024, 512, 128, 8


def _round_up(n, m):
    return (n + m - 1) // m * m


def landmarks_kernel(x_ref, g0_ref, be0_ref, w1_ref, b1_ref,
                     w2_ref, b2_ref, wo_ref, bo_ref, out_ref):
    x = x_ref[...].astype(jnp.float32)                       # (TB, 1024)

    # LayerNorm over the true 968 features (single fused reduction pass).
    # Pad lanes of x are zero, so the raw sums are exact; divide by the true
    # dim, not the padded width.
    s1 = jnp.sum(x, axis=-1, keepdims=True)
    s2 = jnp.sum(x * x, axis=-1, keepdims=True)
    inv_n = jnp.float32(1.0 / D0)
    mu = s1 * inv_n
    var = s2 * inv_n - mu * mu
    h = (x - mu) * jax.lax.rsqrt(var + LN_EPS)
    h = h * g0_ref[...] + be0_ref[...]        # gamma/beta = 0 on pad lanes -> 0

    # linear_1 + relu   (bf16 operands, f32 accumulation on the MXU)
    h = jnp.dot(h.astype(jnp.bfloat16), w1_ref[...],
                preferred_element_type=jnp.float32) + b1_ref[...]
    h = jnp.maximum(h, 0.0)

    # linear_2 + relu
    h = jnp.dot(h.astype(jnp.bfloat16), w2_ref[...],
                preferred_element_type=jnp.float32) + b2_ref[...]
    h = jnp.maximum(h, 0.0)

    # linear_out (no activation; nn.Softmax is never applied in forward)
    out = jnp.dot(h.astype(jnp.bfloat16), wo_ref[...],
                  preferred_element_type=jnp.float32) + bo_ref[...]
    out_ref[...] = out.astype(out_ref.dtype)


@jax.jit
def landmarks_forward(x, prepared_params):
    """x: (B, 968) float32.  prepared_params: output of prepare_params()."""
    B = x.shape[0]
    # MXU fill target: 256 rows on v6e/v7x-class tiles; small batches run as a
    # single (rounded-to-8) tile.
    tb = 256 if B >= 256 else _round_up(B, 8)
    Bp = _round_up(B, tb)

    # Zero-pad batch to a tile multiple and features to the lane-padded width.
    xp = jnp.zeros((Bp, D0P), jnp.float32).at[:B, :D0].set(x.astype(jnp.float32))

    args = [xp] + list(prepared_params)
    # Weights/biases: constant index_map -> DMA'd once, resident across steps.
    weight_specs = [pl.BlockSpec(p.shape, lambda i: (0, 0))
                    for p in prepared_params]
    in_specs = [pl.BlockSpec((tb, D0P), lambda i: (i, 0))] + weight_specs
    out_spec = pl.BlockSpec((tb, D3P), lambda i: (i, 0))

    flops = 2 * Bp * (D0 * D1 + D1 * D2 + D2 * D3)
    param_bytes = sum(p.size * p.dtype.itemsize for p in prepared_params)
    cost = pl.CostEstimate(
        flops=flops,
        transcendentals=Bp,  # one rsqrt per row
        bytes_accessed=param_bytes + Bp * D0P * 4 + Bp * D3P * 4,
    )

    out = pl.pallas_call(
        landmarks_kernel,
        out_shape=jax.ShapeDtypeStruct((Bp, D3P), jnp.float32),
        grid=(Bp // tb,),
        in_specs=in_specs,
        out_specs=out_spec,
        compiler_params=pltpu.CompilerParams(
            dimension_semantics=("parallel",)),
        cost_estimate=cost,
    )(*args)
    return out[:B, :D3]


def init_params(key):
    """Synthetic params with PyTorch-equivalent shapes/init.

    Linear weights are stored (in_features, out_features), i.e. the transpose
    of PyTorch's (out, in), so the kernel computes x @ W + b.
    """
    def linear(k, fan_in, fan_out):
        kw, kb = jax.random.split(k)
        bound = 1.0 / (fan_in ** 0.5)
        w = jax.random.uniform(kw, (fan_in, fan_out), jnp.float32, -bound, bound)
        b = jax.random.uniform(kb, (fan_out,), jnp.float32, -bound, bound)
        return w, b

    k1, k2, k3 = jax.random.split(key, 3)
    g0 = jnp.ones((D0,), jnp.float32)
    be0 = jnp.zeros((D0,), jnp.float32)
    w1, b1 = linear(k1, D0, D1)
    w2, b2 = linear(k2, D1, D2)
    wo, bo = linear(k3, D2, D3)
    return dict(g0=g0, be0=be0, w1=w1, b1=b1, w2=w2, b2=b2, wo=wo, bo=bo)


def prepare_params(p):
    """Pad to lane-aligned dims, reshape 1-D params to (1, N), weights -> bf16."""
    def pad_mat(a, rows, cols, dtype):
        out = jnp.zeros((rows, cols), dtype)
        return out.at[:a.shape[0], :a.shape[1]].set(a.astype(dtype))

    def pad_vec(a, cols, dtype=jnp.float32):
        out = jnp.zeros((1, cols), dtype)
        return out.at[0, :a.shape[0]].set(a.astype(dtype))

    return [
        pad_vec(p["g0"], D0P),                      # gamma: 0 on pad lanes
        pad_vec(p["be0"], D0P),                     # beta:  0 on pad lanes
        pad_mat(p["w1"], D0P, D1P, jnp.bfloat16),
        pad_vec(p["b1"], D1P),
        pad_mat(p["w2"], D1P, D2P, jnp.bfloat16),
        pad_vec(p["b2"], D2P),
        pad_mat(p["wo"], D2P, D3P, jnp.bfloat16),
        pad_vec(p["bo"], D3P),
    ]


def reference_forward(x, p):
    """Pure-JAX f32 reference of the PyTorch forward()."""
    x = x.astype(jnp.float32)
    mu = jnp.mean(x, axis=-1, keepdims=True)
    var = jnp.mean((x - mu) ** 2, axis=-1, keepdims=True)
    h = (x - mu) * jax.lax.rsqrt(var + LN_EPS) * p["g0"] + p["be0"]
    h = jnp.maximum(h @ p["w1"] + p["b1"], 0.0)
    h = jnp.maximum(h @ p["w2"] + p["b2"], 0.0)
    return h @ p["wo"] + p["bo"]


if __name__ == "__main__":
    key = jax.random.PRNGKey(0)
    kx, kp = jax.random.split(key)
    B = 8
    x = jax.random.normal(kx, (B, D0), jnp.float32)

    raw = init_params(kp)
    params = prepare_params(raw)

    out = landmarks_forward(x, params)
    out = jax.block_until_ready(out)
    assert out.shape == (B, D3) and out.dtype == jnp.float32
    assert bool(jnp.all(jnp.isfinite(out)))

    # Loose tolerance: kernel uses bf16 matmul operands vs the f32 reference.
    ref = reference_forward(x, raw)
    assert jnp.allclose(out, ref, rtol=0.1, atol=0.1), \
        float(jnp.max(jnp.abs(out - ref)))

    print("KERNEL_OK")
</pallas_src>

<mosaic_0001>
module attributes {stable_mosaic.version = 11 : i64} {
  func.func @landmarks_kernel(%arg0: i32, %arg1: memref<8x1024xf32, #tpu.memory_space<vmem>>, %arg2: memref<1x1024xf32, #tpu.memory_space<vmem>>, %arg3: memref<1x1024xf32, #tpu.memory_space<vmem>>, %arg4: memref<1024x512xbf16, #tpu.memory_space<vmem>>, %arg5: memref<1x512xf32, #tpu.memory_space<vmem>>, %arg6: memref<512x128xbf16, #tpu.memory_space<vmem>>, %arg7: memref<1x128xf32, #tpu.memory_space<vmem>>, %arg8: memref<128x8xbf16, #tpu.memory_space<vmem>>, %arg9: memref<1x8xf32, #tpu.memory_space<vmem>>, %arg10: memref<8x8xf32, #tpu.memory_space<vmem>>) attributes {dimension_semantics = [#tpu.dimension_semantics<parallel>], iteration_bounds = array<i64: 1>, scalar_prefetch = 0 : i64, scratch_operands = 0 : i64, tpu.core_type = #tpu.core_type<tc>, window_params = [{transform_indices = @transform_0, window_bounds = array<i64: 8, 1024>}, {pipeline_mode = #tpu.pipeline_mode<synchronous>, transform_indices = @transform_1, window_bounds = array<i64: 1, 1024>}, {pipeline_mode = #tpu.pipeline_mode<synchronous>, transform_indices = @transform_2, window_bounds = array<i64: 1, 1024>}, {pipeline_mode = #tpu.pipeline_mode<synchronous>, transform_indices = @transform_3, window_bounds = array<i64: 1024, 512>}, {pipeline_mode = #tpu.pipeline_mode<synchronous>, transform_indices = @transform_4, window_bounds = array<i64: 1, 512>}, {pipeline_mode = #tpu.pipeline_mode<synchronous>, transform_indices = @transform_5, window_bounds = array<i64: 512, 128>}, {pipeline_mode = #tpu.pipeline_mode<synchronous>, transform_indices = @transform_6, window_bounds = array<i64: 1, 128>}, {pipeline_mode = #tpu.pipeline_mode<synchronous>, transform_indices = @transform_7, window_bounds = array<i64: 128, 8>}, {pipeline_mode = #tpu.pipeline_mode<synchronous>, transform_indices = @transform_8, window_bounds = array<i64: 1, 8>}, {transform_indices = @transform_9, window_bounds = array<i64: 8, 8>}]} {
    %c0 = arith.constant 0 : index
    %c0_0 = arith.constant 0 : index
    %0 = vector.load %arg1[%c0, %c0_0] : memref<8x1024xf32, #tpu.memory_space<vmem>>, vector<8x1024xf32>
    %cst = arith.constant dense<0.000000e+00> : vector<8xf32>
    %1 = vector.multi_reduction <add>, %0, %cst [1] : vector<8x1024xf32> to vector<8xf32>
    %2 = vector.shape_cast %1 : vector<8xf32> to vector<8x1xf32>
    %3 = arith.mulf %0, %0 : vector<8x1024xf32>
    %cst_1 = arith.constant dense<0.000000e+00> : vector<8xf32>
    %4 = vector.multi_reduction <add>, %3, %cst_1 [1] : vector<8x1024xf32> to vector<8xf32>
    %5 = vector.shape_cast %4 : vector<8xf32> to vector<8x1xf32>
    %cst_2 = arith.constant 0.00103305781 : f32
    %6 = vector.broadcast %cst_2 : f32 to vector<8x1xf32>
    %7 = arith.mulf %2, %6 : vector<8x1xf32>
    %cst_3 = arith.constant 0.00103305781 : f32
    %8 = vector.broadcast %cst_3 : f32 to vector<8x1xf32>
    %9 = arith.mulf %5, %8 : vector<8x1xf32>
    %10 = arith.mulf %7, %7 : vector<8x1xf32>
    %11 = arith.subf %9, %10 : vector<8x1xf32>
    %12 = vector.broadcast %7 : vector<8x1xf32> to vector<8x1024xf32>
    %13 = arith.subf %0, %12 : vector<8x1024xf32>
    %cst_4 = arith.constant 9.99999974E-6 : f32
    %14 = vector.broadcast %cst_4 : f32 to vector<8x1xf32>
    %15 = arith.addf %11, %14 : vector<8x1xf32>
    %16 = math.rsqrt %15 : vector<8x1xf32>
    %17 = vector.broadcast %16 : vector<8x1xf32> to vector<8x1024xf32>
    %18 = arith.mulf %13, %17 : vector<8x1024xf32>
    %c0_5 = arith.constant 0 : index
    %c0_6 = arith.constant 0 : index
    %19 = vector.load %arg2[%c0_5, %c0_6] : memref<1x1024xf32, #tpu.memory_space<vmem>>, vector<1x1024xf32>
    %20 = vector.broadcast %19 : vector<1x1024xf32> to vector<8x1024xf32>
    %21 = arith.mulf %18, %20 : vector<8x1024xf32>
    %c0_7 = arith.constant 0 : index
    %c0_8 = arith.constant 0 : index
    %22 = vector.load %arg3[%c0_7, %c0_8] : memref<1x1024xf32, #tpu.memory_space<vmem>>, vector<1x1024xf32>
    %23 = vector.broadcast %22 : vector<1x1024xf32> to vector<8x1024xf32>
    %24 = arith.addf %21, %23 : vector<8x1024xf32>
    %25 = arith.truncf %24 : vector<8x1024xf32> to vector<8x1024xbf16>
    %c0_9 = arith.constant 0 : index
    %c0_10 = arith.constant 0 : index
    %26 = vector.load %arg4[%c0_9, %c0_10] : memref<1024x512xbf16, #tpu.memory_space<vmem>>, vector<1024x512xbf16>
    %cst_11 = arith.constant dense<0.000000e+00> : vector<8x512xf32>
    %27 = tpu.matmul %25, %26, %cst_11 {dimension_numbers = #tpu.dot_dimension_numbers<[1], [0], [0], [1], [0, 0, 1, 1], [], []>} : vector<8x1024xbf16>, vector<1024x512xbf16>, vector<8x512xf32> -> vector<8x512xf32>
    %c0_12 = arith.constant 0 : index
    %c0_13 = arith.constant 0 : index
    %28 = vector.load %arg5[%c0_12, %c0_13] : memref<1x512xf32, #tpu.memory_space<vmem>>, vector<1x512xf32>
    %29 = vector.broadcast %28 : vector<1x512xf32> to vector<8x512xf32>
    %30 = arith.addf %27, %29 : vector<8x512xf32>
    %cst_14 = arith.constant 0.000000e+00 : f32
    %31 = vector.broadcast %cst_14 : f32 to vector<8x512xf32>
    %32 = arith.maximumf %30, %31 : vector<8x512xf32>
    %33 = arith.truncf %32 : vector<8x512xf32> to vector<8x512xbf16>
    %c0_15 = arith.constant 0 : index
    %c0_16 = arith.constant 0 : index
    %34 = vector.load %arg6[%c0_15, %c0_16] : memref<512x128xbf16, #tpu.memory_space<vmem>>, vector<512x128xbf16>
    %cst_17 = arith.constant dense<0.000000e+00> : vector<8x128xf32>
    %35 = tpu.matmul %33, %34, %cst_17 {dimension_numbers = #tpu.dot_dimension_numbers<[1], [0], [0], [1], [0, 0, 1, 1], [], []>} : vector<8x512xbf16>, vector<512x128xbf16>, vector<8x128xf32> -> vector<8x128xf32>
    %c0_18 = arith.constant 0 : index
    %c0_19 = arith.constant 0 : index
    %36 = vector.load %arg7[%c0_18, %c0_19] : memref<1x128xf32, #tpu.memory_space<vmem>>, vector<1x128xf32>
    %37 = vector.broadcast %36 : vector<1x128xf32> to vector<8x128xf32>
    %38 = arith.addf %35, %37 : vector<8x128xf32>
    %cst_20 = arith.constant 0.000000e+00 : f32
    %39 = vector.broadcast %cst_20 : f32 to vector<8x128xf32>
    %40 = arith.maximumf %38, %39 : vector<8x128xf32>
    %41 = arith.truncf %40 : vector<8x128xf32> to vector<8x128xbf16>
    %c0_21 = arith.constant 0 : index
    %c0_22 = arith.constant 0 : index
    %42 = vector.load %arg8[%c0_21, %c0_22] : memref<128x8xbf16, #tpu.memory_space<vmem>>, vector<128x8xbf16>
    %cst_23 = arith.constant dense<0.000000e+00> : vector<8x8xf32>
    %43 = tpu.matmul %41, %42, %cst_23 {dimension_numbers = #tpu.dot_dimension_numbers<[1], [0], [0], [1], [0, 0, 1, 1], [], []>} : vector<8x128xbf16>, vector<128x8xbf16>, vector<8x8xf32> -> vector<8x8xf32>
    %c0_24 = arith.constant 0 : index
    %c0_25 = arith.constant 0 : index
    %44 = vector.load %arg9[%c0_24, %c0_25] : memref<1x8xf32, #tpu.memory_space<vmem>>, vector<1x8xf32>
    %45 = vector.broadcast %44 : vector<1x8xf32> to vector<8x8xf32>
    %46 = arith.addf %43, %45 : vector<8x8xf32>
    %c0_26 = arith.constant 0 : index
    %c0_27 = arith.constant 0 : index
    %47 = vector.load %arg10[%c0_26, %c0_27] : memref<8x8xf32, #tpu.memory_space<vmem>>, vector<8x8xf32>
    tpu.vector_store %arg10[%c0_26, %c0_27], %46 {strides = array<i32>} : memref<8x8xf32, #tpu.memory_space<vmem>>, vector<8x8xf32>,
    return
  }
  func.func @transform_0(%arg0: i32) -> (i32, i32) {
    %c0_i32 = arith.constant 0 : i32
    %c0_i32_0 = arith.constant 0 : i32
    return %arg0, %c0_i32 : i32, i32
  }
  func.func @transform_1(%arg0: i32) -> (i32, i32) {
    %c0_i32 = arith.constant 0 : i32
    %c0_i32_0 = arith.constant 0 : i32
    %c0_i32_1 = arith.constant 0 : i32
    return %c0_i32, %c0_i32_0 : i32, i32
  }
  func.func @transform_2(%arg0: i32) -> (i32, i32) {
    %c0_i32 = arith.constant 0 : i32
    %c0_i32_0 = arith.constant 0 : i32
    %c0_i32_1 = arith.constant 0 : i32
    return %c0_i32, %c0_i32_0 : i32, i32
  }
  func.func @transform_3(%arg0: i32) -> (i32, i32) {
    %c0_i32 = arith.constant 0 : i32
    %c0_i32_0 = arith.constant 0 : i32
    %c0_i32_1 = arith.constant 0 : i32
    return %c0_i32, %c0_i32_0 : i32, i32
  }
  func.func @transform_4(%arg0: i32) -> (i32, i32) {
    %c0_i32 = arith.constant 0 : i32
    %c0_i32_0 = arith.constant 0 : i32
    %c0_i32_1 = arith.constant 0 : i32
    return %c0_i32, %c0_i32_0 : i32, i32
  }
  func.func @transform_5(%arg0: i32) -> (i32, i32) {
    %c0_i32 = arith.constant 0 : i32
    %c0_i32_0 = arith.constant 0 : i32
    %c0_i32_1 = arith.constant 0 : i32
    return %c0_i32, %c0_i32_0 : i32, i32
  }
  func.func @transform_6(%arg0: i32) -> (i32, i32) {
    %c0_i32 = arith.constant 0 : i32
    %c0_i32_0 = arith.constant 0 : i32
    %c0_i32_1 = arith.constant 0 : i32
    return %c0_i32, %c0_i32_0 : i32, i32
  }
  func.func @transform_7(%arg0: i32) -> (i32, i32) {
    %c0_i32 = arith.constant 0 : i32
    %c0_i32_0 = arith.constant 0 : i32
    %c0_i32_1 = arith.constant 0 : i32
    return %c0_i32, %c0_i32_0 : i32, i32
  }
  func.func @transform_8(%arg0: i32) -> (i32, i32) {
    %c0_i32 = arith.constant 0 : i32
    %c0_i32_0 = arith.constant 0 : i32
    %c0_i32_1 = arith.constant 0 : i32
    return %c0_i32, %c0_i32_0 : i32, i32
  }
  func.func @transform_9(%arg0: i32) -> (i32, i32) {
    %c0_i32 = arith.constant 0 : i32
    %c0_i32_0 = arith.constant 0 : i32
    return %arg0, %c0_i32 : i32, i32
  }
}

</mosaic_0001>

<llo_original>
// kernel: landmarks_forward.1
$region0: #{landmarks_forward.1}
  #allocation0 [shape = 'u32[]', space=smem, size = 0x4, offset = 0x4, fixed_abs, tag = 'smem constant byte address 0x4 - core index']
  #allocation1 [shape = 'u32[144,128]{1,0:T(1,128)}', space=vmem, size = 0x12000, scoped, tag = 'internal scratch']
  %s0 = inlined_call_operand.vmem [shape: f32[8,1024], index: 0, kind: input, shape index: {}]
  %s1 = inlined_call_operand.vmem [shape: f32[1,1024], index: 1, kind: input, shape index: {}]
  %s2 = inlined_call_operand.vmem [shape: f32[1,1024], index: 2, kind: input, shape index: {}]
  %s3 = inlined_call_operand.hbm [shape: bf16[1024,512], index: 3, kind: input, shape index: {}]
  %s4 = inlined_call_operand.vmem [shape: f32[1,512], index: 4, kind: input, shape index: {}]
  %s5 = inlined_call_operand.vmem [shape: bf16[512,128], index: 5, kind: input, shape index: {}]
  %s6 = inlined_call_operand.vmem [shape: f32[1,128], index: 6, kind: input, shape index: {}]
  %s7 = inlined_call_operand.vmem [shape: bf16[128,8], index: 7, kind: input, shape index: {}]
  %s8 = inlined_call_operand.vmem [shape: f32[1,8], index: 8, kind: input, shape index: {}]
  %s9 = inlined_call_operand.hbm [shape: f32[8,8], index: 9, kind: output, shape index: {}]
  %s10 = sld [smem:[#allocation0]]
  $region50: #{landmarks_forward.1} parent=0
    _
  %s12 = ssub.s32 1, %s10
  %s13 = scalar_select 0, %s12, %s10
  $region1: #{landmarks_forward.1} parent=0
    #allocation2 [shape = 'u8[1048576]{0}', space=vmem, size = 0x100000, scoped, tag = 'input window, operand 3, single buffered']
    #allocation3 [shape = 's32[1]{0}', space=sflag, size = 0x4, scoped, tag = 'scoped memory for landmarks_forward.1']
    #allocation4 [shape = 's32[1]{0}', space=sflag, size = 0x4, scoped, tag = 'scoped memory for landmarks_forward.1']
    #allocation5 [shape = 'u8[4096]{0}', space=vmem, size = 0x1000, scoped, tag = 'output window, operand 0, single buffered']
    %14 = vsyncpa [#allocation3], 0
    %15 = vsyncpa [#allocation4], 0
    // Predicated region
    $region2: #{landmarks_forward.1} parent=1 // pred_check
      _
    $region3: #{landmarks_forward.1} parent=1 // pred_check_branch
      %17 = sbr.rel (0) target = $region5
    $region4: #{landmarks_forward.1} parent=1 // pred_region
      _
    $region5: #{landmarks_forward.1} parent=1 // pred_fallthru
      _
    // Predicated region
    $region6: #{landmarks_forward.1} parent=1 // pred_check
      _
    $region7: #{landmarks_forward.1} parent=1 // pred_check_branch
      %19 = sbr.rel (0) target = $region9
    $region8: #{landmarks_forward.1} parent=1 // pred_region
      _
    $region9: #{landmarks_forward.1} parent=1 // pred_fallthru
      _
    // Predicated region
    $region10: #{landmarks_forward.1} parent=1 // pred_check
      _
    $region11: #{landmarks_forward.1} parent=1 // pred_check_branch
      %21 = sbr.rel (0) target = $region13
    $region12: #{landmarks_forward.1} parent=1 // pred_region
      _
    $region13: #{landmarks_forward.1} parent=1 // pred_fallthru
      _
    // Predicated region
    $region14: #{landmarks_forward.1} parent=1 // pred_check
      _
    $region15: #{landmarks_forward.1} parent=1 // pred_check_branch
      %23 = sbr.rel (0) target = $region17
    $region16: #{landmarks_forward.1} parent=1 // pred_region
      %s25 = ssub.s32 32768, 32768
      %26 = vsyncadd [#allocation3], %s25
      %s27 = sshll.u32 [#allocation2], 4
      %s28 = int_to_ptr.vmem [resolvable:$true] %s27
      %33 = dma.hbm_to_vmem [thread:$0]  %s3, 32768, %s28, [#allocation3], 256, 256, 16
    $region17: #{landmarks_forward.1} parent=1 // pred_fallthru
      _
    // Predicated region
    $region18: #{landmarks_forward.1} parent=1 // pred_check
      _
    $region19: #{landmarks_forward.1} parent=1 // pred_check_branch
      %35 = sbr.rel (0) target = $region21
    $region20: #{landmarks_forward.1} parent=1 // pred_region
      _
    $region21: #{landmarks_forward.1} parent=1 // pred_fallthru
      _
    // Predicated region
    $region22: #{landmarks_forward.1} parent=1 // pred_check
      _
    $region23: #{landmarks_forward.1} parent=1 // pred_check_branch
      %37 = sbr.rel (0) target = $region25
    $region24: #{landmarks_forward.1} parent=1 // pred_region
      _
    $region25: #{landmarks_forward.1} parent=1 // pred_fallthru
      _
    // Predicated region
    $region26: #{landmarks_forward.1} parent=1 // pred_check
      _
    $region27: #{landmarks_forward.1} parent=1 // pred_check_branch
      %39 = sbr.rel (0) target = $region29
    $region28: #{landmarks_forward.1} parent=1 // pred_region
      _
    $region29: #{landmarks_forward.1} parent=1 // pred_fallthru
      _
    // Predicated region
    $region30: #{landmarks_forward.1} parent=1 // pred_check
      _
    $region31: #{landmarks_forward.1} parent=1 // pred_check_branch
      %41 = sbr.rel (0) target = $region33
    $region32: #{landmarks_forward.1} parent=1 // pred_region
      _
    $region33: #{landmarks_forward.1} parent=1 // pred_fallthru
      _
    // Predicated region
    $region34: #{landmarks_forward.1} parent=1 // pred_check
      _
    $region35: #{landmarks_forward.1} parent=1 // pred_check_branch
      %43 = sbr.rel (0) target = $region37
    $region36: #{landmarks_forward.1} parent=1 // pred_region
      _
    $region37: #{landmarks_forward.1} parent=1 // pred_fallthru
      _
    // Predicated region
    $region38: #{landmarks_forward.1} parent=1 // pred_check
      _
    $region39: #{landmarks_forward.1} parent=1 // pred_check_branch
      %45 = sbr.rel (0) target = $region41
    $region40: #{landmarks_forward.1} parent=1 // pred_region
      %46 = dma.done [#allocation3], 32768
    $region41: #{landmarks_forward.1} parent=1 // pred_fallthru
      _
    %v48 = vld [vmem:[%s0] sm:$0xff]
    %v49 = vld [vmem:[%s0 + $0x8] sm:$0xff]
    %v50 = vld [vmem:[%s0 + $0x10] sm:$0xff]
    %v51 = vld [vmem:[%s0 + $0x18] sm:$0xff]
    %v52 = vld [vmem:[%s0 + $0x20] sm:$0xff]
    %v53 = vld [vmem:[%s0 + $0x28] sm:$0xff]
    %v54 = vld [vmem:[%s0 + $0x30] sm:$0xff]
    %v55 = vld [vmem:[%s0 + $0x38] sm:$0xff]
    %v56 = vadd.f32 %v48, %v49
    %v57 = vadd.f32 %v56, %v50
    %v58 = vadd.f32 %v57, %v51
    %v59 = vadd.f32 %v58, %v52
    %v60 = vadd.f32 %v59, %v53
    %v61 = vadd.f32 %v60, %v54
    %v62 = vadd.f32 %v61, %v55
    %63 = vadd.xlane.f32.xlu0 %v62
    %v64 = vpop.xlane.xlu0 %63
    %v65 = vmul.f32 %v48, %v48
    %v66 = vmul.f32 %v49, %v49
    %v67 = vmul.f32 %v50, %v50
    %v68 = vmul.f32 %v51, %v51
    %v69 = vmul.f32 %v52, %v52
    %v70 = vmul.f32 %v53, %v53
    %v71 = vmul.f32 %v54, %v54
    %v72 = vmul.f32 %v55, %v55
    %v73 = vadd.f32 %v65, %v66
    %v74 = vadd.f32 %v73, %v67
    %v75 = vadd.f32 %v74, %v68
    %v76 = vadd.f32 %v75, %v69
    %v77 = vadd.f32 %v76, %v70
    %v78 = vadd.f32 %v77, %v71
    %v79 = vadd.f32 %v78, %v72
    %80 = vadd.xlane.f32.xlu0 %v79
    %v81 = vpop.xlane.xlu0 %80
    %v82 = vmul.f32 %v64, 0.0010330578
    %v83 = vmul.f32 %v81, 0.0010330578
    %v84 = vmul.f32 %v82, %v82
    %v85 = vsub.f32 %v83, %v84
    %v86 = vsub.f32 %v48, %v82
    %v87 = vsub.f32 %v49, %v82
    %v88 = vsub.f32 %v50, %v82
    %v89 = vsub.f32 %v51, %v82
    %v90 = vsub.f32 %v52, %v82
    %v91 = vsub.f32 %v53, %v82
    %v92 = vsub.f32 %v54, %v82
    %v93 = vsub.f32 %v55, %v82
    %v94 = vadd.f32 %v85, 1e-05
    %v95 = vrsqrt.pop %v94
    %v96 = vmul.f32 %v86, %v95
    %v97 = vmul.f32 %v87, %v95
    %v98 = vmul.f32 %v88, %v95
    %v99 = vmul.f32 %v89, %v95
    %v100 = vmul.f32 %v90, %v95
    %v101 = vmul.f32 %v91, %v95
    %v102 = vmul.f32 %v92, %v95
    %v103 = vmul.f32 %v93, %v95
    %v104 = vld [vmem:[%s1] sm:$0xff]
    %v106 = vlaneseq
    %v107 = vshrl.u32 %v106, 7
    %v108 = vsub.s32 0, %v107
    %v109 = vrot.slane %v104, %v108
    %v110 = vlaneseq
    %v111 = vshrl.u32 %v110, 7
    %v112 = vsub.s32 1, %v111
    %v113 = vrot.slane %v104, %v112
    %v114 = vlaneseq
    %v115 = vshrl.u32 %v114, 7
    %v116 = vsub.s32 2, %v115
    %v117 = vrot.slane %v104, %v116
    %v118 = vlaneseq
    %v119 = vshrl.u32 %v118, 7
    %v120 = vsub.s32 3, %v119
    %v121 = vrot.slane %v104, %v120
    %v122 = vlaneseq
    %v123 = vshrl.u32 %v122, 7
    %v124 = vsub.s32 4, %v123
    %v125 = vrot.slane %v104, %v124
    %v126 = vlaneseq
    %v127 = vshrl.u32 %v126, 7
    %v128 = vsub.s32 5, %v127
    %v129 = vrot.slane %v104, %v128
    %v130 = vlaneseq
    %v131 = vshrl.u32 %v130, 7
    %v132 = vsub.s32 6, %v131
    %v133 = vrot.slane %v104, %v132
    %v134 = vlaneseq
    %v135 = vshrl.u32 %v134, 7
    %v136 = vsub.s32 7, %v135
    %v137 = vrot.slane %v104, %v136
    %v146 = vmul.f32 %v96, %v109
    %v147 = vmul.f32 %v97, %v113
    %v148 = vmul.f32 %v98, %v117
    %v149 = vmul.f32 %v99, %v121
    %v150 = vmul.f32 %v100, %v125
    %v151 = vmul.f32 %v101, %v129
    %v152 = vmul.f32 %v102, %v133
    %v153 = vmul.f32 %v103, %v137
    %v154 = vld [vmem:[%s2] sm:$0xff]
    %v156 = vlaneseq
    %v157 = vshrl.u32 %v156, 7
    %v158 = vsub.s32 0, %v157
    %v159 = vrot.slane %v154, %v158
    %v160 = vlaneseq
    %v161 = vshrl.u32 %v160, 7
    %v162 = vsub.s32 1, %v161
    %v163 = vrot.slane %v154, %v162
    %v164 = vlaneseq
    %v165 = vshrl.u32 %v164, 7
    %v166 = vsub.s32 2, %v165
    %v167 = vrot.slane %v154, %v166
    %v168 = vlaneseq
    %v169 = vshrl.u32 %v168, 7
    %v170 = vsub.s32 3, %v169
    %v171 = vrot.slane %v154, %v170
    %v172 = vlaneseq
    %v173 = vshrl.u32 %v172, 7
    %v174 = vsub.s32 4, %v173
    %v175 = vrot.slane %v154, %v174
    %v176 = vlaneseq
    %v177 = vshrl.u32 %v176, 7
    %v178 = vsub.s32 5, %v177
    %v179 = vrot.slane %v154, %v178
    %v180 = vlaneseq
    %v181 = vshrl.u32 %v180, 7
    %v182 = vsub.s32 6, %v181
    %v183 = vrot.slane %v154, %v182
    %v184 = vlaneseq
    %v185 = vshrl.u32 %v184, 7
    %v186 = vsub.s32 7, %v185
    %v187 = vrot.slane %v154, %v186
    %v196 = vadd.f32 %v146, %v159
    %v197 = vadd.f32 %v147, %v163
    %v198 = vadd.f32 %v148, %v167
    %v199 = vadd.f32 %v149, %v171
    %v200 = vadd.f32 %v150, %v175
    %v201 = vadd.f32 %v151, %v179
    %v202 = vadd.f32 %v152, %v183
    %v203 = vadd.f32 %v153, %v187
    %v204 = vpack.c.bf16 %v196, %v196
    %v205 = vpack.c.bf16 %v197, %v197
    %v206 = vpack.c.bf16 %v198, %v198
    %v207 = vpack.c.bf16 %v199, %v199
    %v208 = vpack.c.bf16 %v200, %v200
    %v209 = vpack.c.bf16 %v201, %v201
    %v210 = vpack.c.bf16 %v202, %v202
    %v211 = vpack.c.bf16 %v203, %v203
    %v212 = vld [vmem:[#allocation2] sm:$0xff]
    %v213 = vld [vmem:[#allocation2 + $0x8] sm:$0xff]
    %v214 = vld [vmem:[#allocation2 + $0x10] sm:$0xff]
    %v215 = vld [vmem:[#allocation2 + $0x18] sm:$0xff]
    %v216 = vld [vmem:[#allocation2 + $0x20] sm:$0xff]
    %v217 = vld [vmem:[#allocation2 + $0x28] sm:$0xff]
    %v218 = vld [vmem:[#allocation2 + $0x30] sm:$0xff]
    %v219 = vld [vmem:[#allocation2 + $0x38] sm:$0xff]
    %v220 = vld [vmem:[#allocation2 + $0x40] sm:$0xff]
    %v221 = vld [vmem:[#allocation2 + $0x48] sm:$0xff]
    %v222 = vld [vmem:[#allocation2 + $0x50] sm:$0xff]
    %v223 = vld [vmem:[#allocation2 + $0x58] sm:$0xff]
    %v224 = vld [vmem:[#allocation2 + $0x60] sm:$0xff]
    %v225 = vld [vmem:[#allocation2 + $0x68] sm:$0xff]
    %v226 = vld [vmem:[#allocation2 + $0x70] sm:$0xff]
    %v227 = vld [vmem:[#allocation2 + $0x78] sm:$0xff]
    %v228 = vld [vmem:[#allocation2 + $0x80] sm:$0xff]
    %v229 = vld [vmem:[#allocation2 + $0x88] sm:$0xff]
    %v230 = vld [vmem:[#allocation2 + $0x90] sm:$0xff]
    %v231 = vld [vmem:[#allocation2 + $0x98] sm:$0xff]
    %v232 = vld [vmem:[#allocation2 + $0xa0] sm:$0xff]
    %v233 = vld [vmem:[#allocation2 + $0xa8] sm:$0xff]
    %v234 = vld [vmem:[#allocation2 + $0xb0] sm:$0xff]
    %v235 = vld [vmem:[#allocation2 + $0xb8] sm:$0xff]
    %v236 = vld [vmem:[#allocation2 + $0xc0] sm:$0xff]
    %v237 = vld [vmem:[#allocation2 + $0xc8] sm:$0xff]
    %v238 = vld [vmem:[#allocation2 + $0xd0] sm:$0xff]
    %v239 = vld [vmem:[#allocation2 + $0xd8] sm:$0xff]
    %v240 = vld [vmem:[#allocation2 + $0xe0] sm:$0xff]
    %v241 = vld [vmem:[#allocation2 + $0xe8] sm:$0xff]
    %v242 = vld [vmem:[#allocation2 + $0xf0] sm:$0xff]
    %v243 = vld [vmem:[#allocation2 + $0xf8] sm:$0xff]
    %v244 = vld [vmem:[#allocation2 + $0x100] sm:$0xff]
    %v245 = vld [vmem:[#allocation2 + $0x108] sm:$0xff]
    %v246 = vld [vmem:[#allocation2 + $0x110] sm:$0xff]
    %v247 = vld [vmem:[#allocation2 + $0x118] sm:$0xff]
    %v248 = vld [vmem:[#allocation2 + $0x120] sm:$0xff]
    %v249 = vld [vmem:[#allocation2 + $0x128] sm:$0xff]
    %v250 = vld [vmem:[#allocation2 + $0x130] sm:$0xff]
    %v251 = vld [vmem:[#allocation2 + $0x138] sm:$0xff]
    %v252 = vld [vmem:[#allocation2 + $0x140] sm:$0xff]
    %v253 = vld [vmem:[#allocation2 + $0x148] sm:$0xff]
    %v254 = vld [vmem:[#allocation2 + $0x150] sm:$0xff]
    %v255 = vld [vmem:[#allocation2 + $0x158] sm:$0xff]
    %v256 = vld [vmem:[#allocation2 + $0x160] sm:$0xff]
    %v257 = vld [vmem:[#allocation2 + $0x168] sm:$0xff]
    %v258 = vld [vmem:[#allocation2 + $0x170] sm:$0xff]
    %v259 = vld [vmem:[#allocation2 + $0x178] sm:$0xff]
    %v260 = vld [vmem:[#allocation2 + $0x180] sm:$0xff]
    %v261 = vld [vmem:[#allocation2 + $0x188] sm:$0xff]
    %v262 = vld [vmem:[#allocation2 + $0x190] sm:$0xff]
    %v263 = vld [vmem:[#allocation2 + $0x198] sm:$0xff]
    %v264 = vld [vmem:[#allocation2 + $0x1a0] sm:$0xff]
    %v265 = vld [vmem:[#allocation2 + $0x1a8] sm:$0xff]
    %v266 = vld [vmem:[#allocation2 + $0x1b0] sm:$0xff]
    %v267 = vld [vmem:[#allocation2 + $0x1b8] sm:$0xff]
    %v268 = vld [vmem:[#allocation2 + $0x1c0] sm:$0xff]
    %v269 = vld [vmem:[#allocation2 + $0x1c8] sm:$0xff]
    %v270 = vld [vmem:[#allocation2 + $0x1d0] sm:$0xff]
    %v271 = vld [vmem:[#allocation2 + $0x1d8] sm:$0xff]
    %v272 = vld [vmem:[#allocation2 + $0x1e0] sm:$0xff]
    %v273 = vld [vmem:[#allocation2 + $0x1e8] sm:$0xff]
    %v274 = vld [vmem:[#allocation2 + $0x1f0] sm:$0xff]
    %v275 = vld [vmem:[#allocation2 + $0x1f8] sm:$0xff]
    %v276 = vld [vmem:[#allocation2 + $0x200] sm:$0xff]
    %v277 = vld [vmem:[#allocation2 + $0x208] sm:$0xff]
    %v278 = vld [vmem:[#allocation2 + $0x210] sm:$0xff]
    %v279 = vld [vmem:[#allocation2 + $0x218] sm:$0xff]
    %v280 = vld [vmem:[#allocation2 + $0x220] sm:$0xff]
    %v281 = vld [vmem:[#allocation2 + $0x228] sm:$0xff]
    %v282 = vld [vmem:[#allocation2 + $0x230] sm:$0xff]
    %v283 = vld [vmem:[#allocation2 + $0x238] sm:$0xff]
    %v284 = vld [vmem:[#allocation2 + $0x240] sm:$0xff]
    %v285 = vld [vmem:[#allocation2 + $0x248] sm:$0xff]
    %v286 = vld [vmem:[#allocation2 + $0x250] sm:$0xff]
    %v287 = vld [vmem:[#allocation2 + $0x258] sm:$0xff]
    %v288 = vld [vmem:[#allocation2 + $0x260] sm:$0xff]
    %v289 = vld [vmem:[#allocation2 + $0x268] sm:$0xff]
    %v290 = vld [vmem:[#allocation2 + $0x270] sm:$0xff]
    %v291 = vld [vmem:[#allocation2 + $0x278] sm:$0xff]
    %v292 = vld [vmem:[#allocation2 + $0x280] sm:$0xff]
    %v293 = vld [vmem:[#allocation2 + $0x288] sm:$0xff]
    %v294 = vld [vmem:[#allocation2 + $0x290] sm:$0xff]
    %v295 = vld [vmem:[#allocation2 + $0x298] sm:$0xff]
    %v296 = vld [vmem:[#allocation2 + $0x2a0] sm:$0xff]
    %v297 = vld [vmem:[#allocation2 + $0x2a8] sm:$0xff]
    %v298 = vld [vmem:[#allocation2 + $0x2b0] sm:$0xff]
    %v299 = vld [vmem:[#allocation2 + $0x2b8] sm:$0xff]
    %v300 = vld [vmem:[#allocation2 + $0x2c0] sm:$0xff]
    %v301 = vld [vmem:[#allocation2 + $0x2c8] sm:$0xff]
    %v302 = vld [vmem:[#allocation2 + $0x2d0] sm:$0xff]
    %v303 = vld [vmem:[#allocation2 + $0x2d8] sm:$0xff]
    %v304 = vld [vmem:[#allocation2 + $0x2e0] sm:$0xff]
    %v305 = vld [vmem:[#allocation2 + $0x2e8] sm:$0xff]
    %v306 = vld [vmem:[#allocation2 + $0x2f0] sm:$0xff]
    %v307 = vld [vmem:[#allocation2 + $0x2f8] sm:$0xff]
    %v308 = vld [vmem:[#allocation2 + $0x300] sm:$0xff]
    %v309 = vld [vmem:[#allocation2 + $0x308] sm:$0xff]
    %v310 = vld [vmem:[#allocation2 + $0x310] sm:$0xff]
    %v311 = vld [vmem:[#allocation2 + $0x318] sm:$0xff]
    %v312 = vld [vmem:[#allocation2 + $0x320] sm:$0xff]
    %v313 = vld [vmem:[#allocation2 + $0x328] sm:$0xff]
    %v314 = vld [vmem:[#allocation2 + $0x330] sm:$0xff]
    %v315 = vld [vmem:[#allocation2 + $0x338] sm:$0xff]
    %v316 = vld [vmem:[#allocation2 + $0x340] sm:$0xff]
    %v317 = vld [vmem:[#allocation2 + $0x348] sm:$0xff]
    %v318 = vld [vmem:[#allocation2 + $0x350] sm:$0xff]
    %v319 = vld [vmem:[#allocation2 + $0x358] sm:$0xff]
    %v320 = vld [vmem:[#allocation2 + $0x360] sm:$0xff]
    %v321 = vld [vmem:[#allocation2 + $0x368] sm:$0xff]
    %v322 = vld [vmem:[#allocation2 + $0x370] sm:$0xff]
    %v323 = vld [vmem:[#allocation2 + $0x378] sm:$0xff]
    %v324 = vld [vmem:[#allocation2 + $0x380] sm:$0xff]
    %v325 = vld [vmem:[#allocation2 + $0x388] sm:$0xff]
    %v326 = vld [vmem:[#allocation2 + $0x390] sm:$0xff]
    %v327 = vld [vmem:[#allocation2 + $0x398] sm:$0xff]
    %v328 = vld [vmem:[#allocation2 + $0x3a0] sm:$0xff]
    %v329 = vld [vmem:[#allocation2 + $0x3a8] sm:$0xff]
    %v330 = vld [vmem:[#allocation2 + $0x3b0] sm:$0xff]
    %v331 = vld [vmem:[#allocation2 + $0x3b8] sm:$0xff]
    %v332 = vld [vmem:[#allocation2 + $0x3c0] sm:$0xff]
    %v333 = vld [vmem:[#allocation2 + $0x3c8] sm:$0xff]
    %v334 = vld [vmem:[#allocation2 + $0x3d0] sm:$0xff]
    %v335 = vld [vmem:[#allocation2 + $0x3d8] sm:$0xff]
    %v336 = vld [vmem:[#allocation2 + $0x3e0] sm:$0xff]
    %v337 = vld [vmem:[#allocation2 + $0x3e8] sm:$0xff]
    %v338 = vld [vmem:[#allocation2 + $0x3f0] sm:$0xff]
    %v339 = vld [vmem:[#allocation2 + $0x3f8] sm:$0xff]
    %v340 = vld [vmem:[#allocation2 + $0x400] sm:$0xff]
    %v341 = vld [vmem:[#allocation2 + $0x408] sm:$0xff]
    %v342 = vld [vmem:[#allocation2 + $0x410] sm:$0xff]
    %v343 = vld [vmem:[#allocation2 + $0x418] sm:$0xff]
    %v344 = vld [vmem:[#allocation2 + $0x420] sm:$0xff]
    %v345 = vld [vmem:[#allocation2 + $0x428] sm:$0xff]
    %v346 = vld [vmem:[#allocation2 + $0x430] sm:$0xff]
    %v347 = vld [vmem:[#allocation2 + $0x438] sm:$0xff]
    %v348 = vld [vmem:[#allocation2 + $0x440] sm:$0xff]
    %v349 = vld [vmem:[#allocation2 + $0x448] sm:$0xff]
    %v350 = vld [vmem:[#allocation2 + $0x450] sm:$0xff]
    %v351 = vld [vmem:[#allocation2 + $0x458] sm:$0xff]
    %v352 = vld [vmem:[#allocation2 + $0x460] sm:$0xff]
    %v353 = vld [vmem:[#allocation2 + $0x468] sm:$0xff]
    %v354 = vld [vmem:[#allocation2 + $0x470] sm:$0xff]
    %v355 = vld [vmem:[#allocation2 + $0x478] sm:$0xff]
    %v356 = vld [vmem:[#allocation2 + $0x480] sm:$0xff]
    %v357 = vld [vmem:[#allocation2 + $0x488] sm:$0xff]
    %v358 = vld [vmem:[#allocation2 + $0x490] sm:$0xff]
    %v359 = vld [vmem:[#allocation2 + $0x498] sm:$0xff]
    %v360 = vld [vmem:[#allocation2 + $0x4a0] sm:$0xff]
    %v361 = vld [vmem:[#allocation2 + $0x4a8] sm:$0xff]
    %v362 = vld [vmem:[#allocation2 + $0x4b0] sm:$0xff]
    %v363 = vld [vmem:[#allocation2 + $0x4b8] sm:$0xff]
    %v364 = vld [vmem:[#allocation2 + $0x4c0] sm:$0xff]
    %v365 = vld [vmem:[#allocation2 + $0x4c8] sm:$0xff]
    %v366 = vld [vmem:[#allocation2 + $0x4d0] sm:$0xff]
    %v367 = vld [vmem:[#allocation2 + $0x4d8] sm:$0xff]
    %v368 = vld [vmem:[#allocation2 + $0x4e0] sm:$0xff]
    %v369 = vld [vmem:[#allocation2 + $0x4e8] sm:$0xff]
    %v370 = vld [vmem:[#allocation2 + $0x4f0] sm:$0xff]
    %v371 = vld [vmem:[#allocation2 + $0x4f8] sm:$0xff]
    %v372 = vld [vmem:[#allocation2 + $0x500] sm:$0xff]
    %v373 = vld [vmem:[#allocation2 + $0x508] sm:$0xff]
    %v374 = vld [vmem:[#allocation2 + $0x510] sm:$0xff]
    %v375 = vld [vmem:[#allocation2 + $0x518] sm:$0xff]
    %v376 = vld [vmem:[#allocation2 + $0x520] sm:$0xff]
    %v377 = vld [vmem:[#allocation2 + $0x528] sm:$0xff]
    %v378 = vld [vmem:[#allocation2 + $0x530] sm:$0xff]
    %v379 = vld [vmem:[#allocation2 + $0x538] sm:$0xff]
    %v380 = vld [vmem:[#allocation2 + $0x540] sm:$0xff]
    %v381 = vld [vmem:[#allocation2 + $0x548] sm:$0xff]
    %v382 = vld [vmem:[#allocation2 + $0x550] sm:$0xff]
    %v383 = vld [vmem:[#allocation2 + $0x558] sm:$0xff]
    %v384 = vld [vmem:[#allocation2 + $0x560] sm:$0xff]
    %v385 = vld [vmem:[#allocation2 + $0x568] sm:$0xff]
    %v386 = vld [vmem:[#allocation2 + $0x570] sm:$0xff]
    %v387 = vld [vmem:[#allocation2 + $0x578] sm:$0xff]
    %v388 = vld [vmem:[#allocation2 + $0x580] sm:$0xff]
    %v389 = vld [vmem:[#allocation2 + $0x588] sm:$0xff]
    %v390 = vld [vmem:[#allocation2 + $0x590] sm:$0xff]
    %v391 = vld [vmem:[#allocation2 + $0x598] sm:$0xff]
    %v392 = vld [vmem:[#allocation2 + $0x5a0] sm:$0xff]
    %v393 = vld [vmem:[#allocation2 + $0x5a8] sm:$0xff]
    %v394 = vld [vmem:[#allocation2 + $0x5b0] sm:$0xff]
    %v395 = vld [vmem:[#allocation2 + $0x5b8] sm:$0xff]
    %v396 = vld [vmem:[#allocation2 + $0x5c0] sm:$0xff]
    %v397 = vld [vmem:[#allocation2 + $0x5c8] sm:$0xff]
    %v398 = vld [vmem:[#allocation2 + $0x5d0] sm:$0xff]
    %v399 = vld [vmem:[#allocation2 + $0x5d8] sm:$0xff]
    %v400 = vld [vmem:[#allocation2 + $0x5e0] sm:$0xff]
    %v401 = vld [vmem:[#allocation2 + $0x5e8] sm:$0xff]
    %v402 = vld [vmem:[#allocation2 + $0x5f0] sm:$0xff]
    %v403 = vld [vmem:[#allocation2 + $0x5f8] sm:$0xff]
    %v404 = vld [vmem:[#allocation2 + $0x600] sm:$0xff]
    %v405 = vld [vmem:[#allocation2 + $0x608] sm:$0xff]
    %v406 = vld [vmem:[#allocation2 + $0x610] sm:$0xff]
    %v407 = vld [vmem:[#allocation2 + $0x618] sm:$0xff]
    %v408 = vld [vmem:[#allocation2 + $0x620] sm:$0xff]
    %v409 = vld [vmem:[#allocation2 + $0x628] sm:$0xff]
    %v410 = vld [vmem:[#allocation2 + $0x630] sm:$0xff]
    %v411 = vld [vmem:[#allocation2 + $0x638] sm:$0xff]
    %v412 = vld [vmem:[#allocation2 + $0x640] sm:$0xff]
    %v413 = vld [vmem:[#allocation2 + $0x648] sm:$0xff]
    %v414 = vld [vmem:[#allocation2 + $0x650] sm:$0xff]
    %v415 = vld [vmem:[#allocation2 + $0x658] sm:$0xff]
    %v416 = vld [vmem:[#allocation2 + $0x660] sm:$0xff]
    %v417 = vld [vmem:[#allocation2 + $0x668] sm:$0xff]
    %v418 = vld [vmem:[#allocation2 + $0x670] sm:$0xff]
    %v419 = vld [vmem:[#allocation2 + $0x678] sm:$0xff]
    %v420 = vld [vmem:[#allocation2 + $0x680] sm:$0xff]
    %v421 = vld [vmem:[#allocation2 + $0x688] sm:$0xff]
    %v422 = vld [vmem:[#allocation2 + $0x690] sm:$0xff]
    %v423 = vld [vmem:[#allocation2 + $0x698] sm:$0xff]
    %v424 = vld [vmem:[#allocation2 + $0x6a0] sm:$0xff]
    %v425 = vld [vmem:[#allocation2 + $0x6a8] sm:$0xff]
    %v426 = vld [vmem:[#allocation2 + $0x6b0] sm:$0xff]
    %v427 = vld [vmem:[#allocation2 + $0x6b8] sm:$0xff]
    %v428 = vld [vmem:[#allocation2 + $0x6c0] sm:$0xff]
    %v429 = vld [vmem:[#allocation2 + $0x6c8] sm:$0xff]
    %v430 = vld [vmem:[#allocation2 + $0x6d0] sm:$0xff]
    %v431 = vld [vmem:[#allocation2 + $0x6d8] sm:$0xff]
    %v432 = vld [vmem:[#allocation2 + $0x6e0] sm:$0xff]
    %v433 = vld [vmem:[#allocation2 + $0x6e8] sm:$0xff]
    %v434 = vld [vmem:[#allocation2 + $0x6f0] sm:$0xff]
    %v435 = vld [vmem:[#allocation2 + $0x6f8] sm:$0xff]
    %v436 = vld [vmem:[#allocation2 + $0x700] sm:$0xff]
    %v437 = vld [vmem:[#allocation2 + $0x708] sm:$0xff]
    %v438 = vld [vmem:[#allocation2 + $0x710] sm:$0xff]
    %v439 = vld [vmem:[#allocation2 + $0x718] sm:$0xff]
    %v440 = vld [vmem:[#allocation2 + $0x720] sm:$0xff]
    %v441 = vld [vmem:[#allocation2 + $0x728] sm:$0xff]
    %v442 = vld [vmem:[#allocation2 + $0x730] sm:$0xff]
    %v443 = vld [vmem:[#allocation2 + $0x738] sm:$0xff]
    %v444 = vld [vmem:[#allocation2 + $0x740] sm:$0xff]
    %v445 = vld [vmem:[#allocation2 + $0x748] sm:$0xff]
    %v446 = vld [vmem:[#allocation2 + $0x750] sm:$0xff]
    %v447 = vld [vmem:[#allocation2 + $0x758] sm:$0xff]
    %v448 = vld [vmem:[#allocation2 + $0x760] sm:$0xff]
    %v449 = vld [vmem:[#allocation2 + $0x768] sm:$0xff]
    %v450 = vld [vmem:[#allocation2 + $0x770] sm:$0xff]
    %v451 = vld [vmem:[#allocation2 + $0x778] sm:$0xff]
    %v452 = vld [vmem:[#allocation2 + $0x780] sm:$0xff]
    %v453 = vld [vmem:[#allocation2 + $0x788] sm:$0xff]
    %v454 = vld [vmem:[#allocation2 + $0x790] sm:$0xff]
    %v455 = vld [vmem:[#allocation2 + $0x798] sm:$0xff]
    %v456 = vld [vmem:[#allocation2 + $0x7a0] sm:$0xff]
    %v457 = vld [vmem:[#allocation2 + $0x7a8] sm:$0xff]
    %v458 = vld [vmem:[#allocation2 + $0x7b0] sm:$0xff]
    %v459 = vld [vmem:[#allocation2 + $0x7b8] sm:$0xff]
    %v460 = vld [vmem:[#allocation2 + $0x7c0] sm:$0xff]
    %v461 = vld [vmem:[#allocation2 + $0x7c8] sm:$0xff]
    %v462 = vld [vmem:[#allocation2 + $0x7d0] sm:$0xff]
    %v463 = vld [vmem:[#allocation2 + $0x7d8] sm:$0xff]
    %v464 = vld [vmem:[#allocation2 + $0x7e0] sm:$0xff]
    %v465 = vld [vmem:[#allocation2 + $0x7e8] sm:$0xff]
    %v466 = vld [vmem:[#allocation2 + $0x7f0] sm:$0xff]
    %v467 = vld [vmem:[#allocation2 + $0x7f8] sm:$0xff]
    %v468 = vld [vmem:[%s4] sm:$0xf]
    %v470 = vlaneseq
    %v471 = vshrl.u32 %v470, 7
    %v472 = vsub.s32 0, %v471
    %v473 = vrot.slane %v468, %v472
    %v474 = vlaneseq
    %v475 = vshrl.u32 %v474, 7
    %v476 = vsub.s32 1, %v475
    %v477 = vrot.slane %v468, %v476
    %v478 = vlaneseq
    %v479 = vshrl.u32 %v478, 7
    %v480 = vsub.s32 2, %v479
    %v481 = vrot.slane %v468, %v480
    %v482 = vlaneseq
    %v483 = vshrl.u32 %v482, 7
    %v484 = vsub.s32 3, %v483
    %v485 = vrot.slane %v468, %v484
    %v746 = vunpack.c.l.b16 %v212
    %v747 = vunpack.c.h.b16 %v212
    %v748 = vunpack.c.l.b16 %v213
    %v749 = vunpack.c.h.b16 %v213
    %v750 = vunpack.c.l.b16 %v214
    %v751 = vunpack.c.h.b16 %v214
    %v752 = vunpack.c.l.b16 %v215
    %v753 = vunpack.c.h.b16 %v215
    %v754 = vunpack.c.l.b16 %v216
    %v755 = vunpack.c.h.b16 %v216
    %v756 = vunpack.c.l.b16 %v217
    %v757 = vunpack.c.h.b16 %v217
    %v758 = vunpack.c.l.b16 %v218
    %v759 = vunpack.c.h.b16 %v218
    %v760 = vunpack.c.l.b16 %v219
    %v761 = vunpack.c.h.b16 %v219
    %v762 = vunpack.c.l.b16 %v220
    %v763 = vunpack.c.h.b16 %v220
    %v764 = vunpack.c.l.b16 %v221
    %v765 = vunpack.c.h.b16 %v221
    %v766 = vunpack.c.l.b16 %v222
    %v767 = vunpack.c.h.b16 %v222
    %v768 = vunpack.c.l.b16 %v223
    %v769 = vunpack.c.h.b16 %v223
    %v770 = vunpack.c.l.b16 %v224
    %v771 = vunpack.c.h.b16 %v224
    %v772 = vunpack.c.l.b16 %v225
    %v773 = vunpack.c.h.b16 %v225
    %v774 = vunpack.c.l.b16 %v226
    %v775 = vunpack.c.h.b16 %v226
    %v776 = vunpack.c.l.b16 %v227
    %v777 = vunpack.c.h.b16 %v227
    %v778 = vunpack.c.l.b16 %v228
    %v779 = vunpack.c.h.b16 %v228
    %v780 = vunpack.c.l.b16 %v229
    %v781 = vunpack.c.h.b16 %v229
    %v782 = vunpack.c.l.b16 %v230
    %v783 = vunpack.c.h.b16 %v230
    %v784 = vunpack.c.l.b16 %v231
    %v785 = vunpack.c.h.b16 %v231
    %v786 = vunpack.c.l.b16 %v232
    %v787 = vunpack.c.h.b16 %v232
    %v788 = vunpack.c.l.b16 %v233
    %v789 = vunpack.c.h.b16 %v233
    %v790 = vunpack.c.l.b16 %v234
    %v791 = vunpack.c.h.b16 %v234
    %v792 = vunpack.c.l.b16 %v235
    %v793 = vunpack.c.h.b16 %v235
    %v794 = vunpack.c.l.b16 %v236
    %v795 = vunpack.c.h.b16 %v236
    %v796 = vunpack.c.l.b16 %v237
    %v797 = vunpack.c.h.b16 %v237
    %v798 = vunpack.c.l.b16 %v238
    %v799 = vunpack.c.h.b16 %v238
    %v800 = vunpack.c.l.b16 %v239
    %v801 = vunpack.c.h.b16 %v239
    %v802 = vunpack.c.l.b16 %v240
    %v803 = vunpack.c.h.b16 %v240
    %v804 = vunpack.c.l.b16 %v241
    %v805 = vunpack.c.h.b16 %v241
    %v806 = vunpack.c.l.b16 %v242
    %v807 = vunpack.c.h.b16 %v242
    %v808 = vunpack.c.l.b16 %v243
    %v809 = vunpack.c.h.b16 %v243
    %v810 = vunpack.c.l.b16 %v244
    %v811 = vunpack.c.h.b16 %v244
    %v812 = vunpack.c.l.b16 %v245
    %v813 = vunpack.c.h.b16 %v245
    %v814 = vunpack.c.l.b16 %v246
    %v815 = vunpack.c.h.b16 %v246
    %v816 = vunpack.c.l.b16 %v247
    %v817 = vunpack.c.h.b16 %v247
    %v818 = vunpack.c.l.b16 %v248
    %v819 = vunpack.c.h.b16 %v248
    %v820 = vunpack.c.l.b16 %v249
    %v821 = vunpack.c.h.b16 %v249
    %v822 = vunpack.c.l.b16 %v250
    %v823 = vunpack.c.h.b16 %v250
    %v824 = vunpack.c.l.b16 %v251
    %v825 = vunpack.c.h.b16 %v251
    %v826 = vunpack.c.l.b16 %v252
    %v827 = vunpack.c.h.b16 %v252
    %v828 = vunpack.c.l.b16 %v253
    %v829 = vunpack.c.h.b16 %v253
    %v830 = vunpack.c.l.b16 %v254
    %v831 = vunpack.c.h.b16 %v254
    %v832 = vunpack.c.l.b16 %v255
    %v833 = vunpack.c.h.b16 %v255
    %v834 = vunpack.c.l.b16 %v256
    %v835 = vunpack.c.h.b16 %v256
    %v836 = vunpack.c.l.b16 %v257
    %v837 = vunpack.c.h.b16 %v257
    %v838 = vunpack.c.l.b16 %v258
    %v839 = vunpack.c.h.b16 %v258
    %v840 = vunpack.c.l.b16 %v259
    %v841 = vunpack.c.h.b16 %v259
    %v842 = vunpack.c.l.b16 %v260
    %v843 = vunpack.c.h.b16 %v260
    %v844 = vunpack.c.l.b16 %v261
    %v845 = vunpack.c.h.b16 %v261
    %v846 = vunpack.c.l.b16 %v262
    %v847 = vunpack.c.h.b16 %v262
    %v848 = vunpack.c.l.b16 %v263
    %v849 = vunpack.c.h.b16 %v263
    %v850 = vunpack.c.l.b16 %v264
    %v851 = vunpack.c.h.b16 %v264
    %v852 = vunpack.c.l.b16 %v265
    %v853 = vunpack.c.h.b16 %v265
    %v854 = vunpack.c.l.b16 %v266
    %v855 = vunpack.c.h.b16 %v266
    %v856 = vunpack.c.l.b16 %v267
    %v857 = vunpack.c.h.b16 %v267
    %v858 = vunpack.c.l.b16 %v268
    %v859 = vunpack.c.h.b16 %v268
    %v860 = vunpack.c.l.b16 %v269
    %v861 = vunpack.c.h.b16 %v269
    %v862 = vunpack.c.l.b16 %v270
    %v863 = vunpack.c.h.b16 %v270
    %v864 = vunpack.c.l.b16 %v271
    %v865 = vunpack.c.h.b16 %v271
    %v866 = vunpack.c.l.b16 %v272
    %v867 = vunpack.c.h.b16 %v272
    %v868 = vunpack.c.l.b16 %v273
    %v869 = vunpack.c.h.b16 %v273
    %v870 = vunpack.c.l.b16 %v274
    %v871 = vunpack.c.h.b16 %v274
    %v872 = vunpack.c.l.b16 %v275
    %v873 = vunpack.c.h.b16 %v275
    %v874 = vunpack.c.l.b16 %v276
    %v875 = vunpack.c.h.b16 %v276
    %v876 = vunpack.c.l.b16 %v277
    %v877 = vunpack.c.h.b16 %v277
    %v878 = vunpack.c.l.b16 %v278
    %v879 = vunpack.c.h.b16 %v278
    %v880 = vunpack.c.l.b16 %v279
    %v881 = vunpack.c.h.b16 %v279
    %v882 = vunpack.c.l.b16 %v280
    %v883 = vunpack.c.h.b16 %v280
    %v884 = vunpack.c.l.b16 %v281
    %v885 = vunpack.c.h.b16 %v281
    %v886 = vunpack.c.l.b16 %v282
    %v887 = vunpack.c.h.b16 %v282
    %v888 = vunpack.c.l.b16 %v283
    %v889 = vunpack.c.h.b16 %v283
    %v890 = vunpack.c.l.b16 %v284
    %v891 = vunpack.c.h.b16 %v284
    %v892 = vunpack.c.l.b16 %v285
    %v893 = vunpack.c.h.b16 %v285
    %v894 = vunpack.c.l.b16 %v286
    %v895 = vunpack.c.h.b16 %v286
    %v896 = vunpack.c.l.b16 %v287
    %v897 = vunpack.c.h.b16 %v287
    %v898 = vunpack.c.l.b16 %v288
    %v899 = vunpack.c.h.b16 %v288
    %v900 = vunpack.c.l.b16 %v289
    %v901 = vunpack.c.h.b16 %v289
    %v902 = vunpack.c.l.b16 %v290
    %v903 = vunpack.c.h.b16 %v290
    %v904 = vunpack.c.l.b16 %v291
    %v905 = vunpack.c.h.b16 %v291
    %v906 = vunpack.c.l.b16 %v292
    %v907 = vunpack.c.h.b16 %v292
    %v908 = vunpack.c.l.b16 %v293
    %v909 = vunpack.c.h.b16 %v293
    %v910 = vunpack.c.l.b16 %v294
    %v911 = vunpack.c.h.b16 %v294
    %v912 = vunpack.c.l.b16 %v295
    %v913 = vunpack.c.h.b16 %v295
    %v914 = vunpack.c.l.b16 %v296
    %v915 = vunpack.c.h.b16 %v296
    %v916 = vunpack.c.l.b16 %v297
    %v917 = vunpack.c.h.b16 %v297
    %v918 = vunpack.c.l.b16 %v298
    %v919 = vunpack.c.h.b16 %v298
    %v920 = vunpack.c.l.b16 %v299
    %v921 = vunpack.c.h.b16 %v299
    %v922 = vunpack.c.l.b16 %v300
    %v923 = vunpack.c.h.b16 %v300
    %v924 = vunpack.c.l.b16 %v301
    %v925 = vunpack.c.h.b16 %v301
    %v926 = vunpack.c.l.b16 %v302
    %v927 = vunpack.c.h.b16 %v302
    %v928 = vunpack.c.l.b16 %v303
    %v929 = vunpack.c.h.b16 %v303
    %v930 = vunpack.c.l.b16 %v304
    %v931 = vunpack.c.h.b16 %v304
    %v932 = vunpack.c.l.b16 %v305
    %v933 = vunpack.c.h.b16 %v305
    %v934 = vunpack.c.l.b16 %v306
    %v935 = vunpack.c.h.b16 %v306
    %v936 = vunpack.c.l.b16 %v307
    %v937 = vunpack.c.h.b16 %v307
    %v938 = vunpack.c.l.b16 %v308
    %v939 = vunpack.c.h.b16 %v308
    %v940 = vunpack.c.l.b16 %v309
    %v941 = vunpack.c.h.b16 %v309
    %v942 = vunpack.c.l.b16 %v310
    %v943 = vunpack.c.h.b16 %v310
    %v944 = vunpack.c.l.b16 %v311
    %v945 = vunpack.c.h.b16 %v311
    %v946 = vunpack.c.l.b16 %v312
    %v947 = vunpack.c.h.b16 %v312
    %v948 = vunpack.c.l.b16 %v313
    %v949 = vunpack.c.h.b16 %v313
    %v950 = vunpack.c.l.b16 %v314
    %v951 = vunpack.c.h.b16 %v314
    %v952 = vunpack.c.l.b16 %v315
    %v953 = vunpack.c.h.b16 %v315
    %v954 = vunpack.c.l.b16 %v316
    %v955 = vunpack.c.h.b16 %v316
    %v956 = vunpack.c.l.b16 %v317
    %v957 = vunpack.c.h.b16 %v317
    %v958 = vunpack.c.l.b16 %v318
    %v959 = vunpack.c.h.b16 %v318
    %v960 = vunpack.c.l.b16 %v319
    %v961 = vunpack.c.h.b16 %v319
    %v962 = vunpack.c.l.b16 %v320
    %v963 = vunpack.c.h.b16 %v320
    %v964 = vunpack.c.l.b16 %v321
    %v965 = vunpack.c.h.b16 %v321
    %v966 = vunpack.c.l.b16 %v322
    %v967 = vunpack.c.h.b16 %v322
    %v968 = vunpack.c.l.b16 %v323
    %v969 = vunpack.c.h.b16 %v323
    %v970 = vunpack.c.l.b16 %v324
    %v971 = vunpack.c.h.b16 %v324
    %v972 = vunpack.c.l.b16 %v325
    %v973 = vunpack.c.h.b16 %v325
    %v974 = vunpack.c.l.b16 %v326
    %v975 = vunpack.c.h.b16 %v326
    %v976 = vunpack.c.l.b16 %v327
    %v977 = vunpack.c.h.b16 %v327
    %v978 = vunpack.c.l.b16 %v328
    %v979 = vunpack.c.h.b16 %v328
    %v980 = vunpack.c.l.b16 %v329
    %v981 = vunpack.c.h.b16 %v329
    %v982 = vunpack.c.l.b16 %v330
    %v983 = vunpack.c.h.b16 %v330
    %v984 = vunpack.c.l.b16 %v331
    %v985 = vunpack.c.h.b16 %v331
    %v986 = vunpack.c.l.b16 %v332
    %v987 = vunpack.c.h.b16 %v332
    %v988 = vunpack.c.l.b16 %v333
    %v989 = vunpack.c.h.b16 %v333
    %v990 = vunpack.c.l.b16 %v334
    %v991 = vunpack.c.h.b16 %v334
    %v992 = vunpack.c.l.b16 %v335
    %v993 = vunpack.c.h.b16 %v335
    %v994 = vunpack.c.l.b16 %v336
    %v995 = vunpack.c.h.b16 %v336
    %v996 = vunpack.c.l.b16 %v337
    %v997 = vunpack.c.h.b16 %v337
    %v998 = vunpack.c.l.b16 %v338
    %v999 = vunpack.c.h.b16 %v338
    %v1000 = vunpack.c.l.b16 %v339
    %v1001 = vunpack.c.h.b16 %v339
    %v1002 = vunpack.c.l.b16 %v340
    %v1003 = vunpack.c.h.b16 %v340
    %v1004 = vunpack.c.l.b16 %v341
    %v1005 = vunpack.c.h.b16 %v341
    %v1006 = vunpack.c.l.b16 %v342
    %v1007 = vunpack.c.h.b16 %v342
    %v1008 = vunpack.c.l.b16 %v343
    %v1009 = vunpack.c.h.b16 %v343
    %v1010 = vunpack.c.l.b16 %v344
    %v1011 = vunpack.c.h.b16 %v344
    %v1012 = vunpack.c.l.b16 %v345
    %v1013 = vunpack.c.h.b16 %v345
    %v1014 = vunpack.c.l.b16 %v346
    %v1015 = vunpack.c.h.b16 %v346
    %v1016 = vunpack.c.l.b16 %v347
    %v1017 = vunpack.c.h.b16 %v347
    %v1018 = vunpack.c.l.b16 %v348
    %v1019 = vunpack.c.h.b16 %v348
    %v1020 = vunpack.c.l.b16 %v349
    %v1021 = vunpack.c.h.b16 %v349
    %v1022 = vunpack.c.l.b16 %v350
    %v1023 = vunpack.c.h.b16 %v350
    %v1024 = vunpack.c.l.b16 %v351
    %v1025 = vunpack.c.h.b16 %v351
    %v1026 = vunpack.c.l.b16 %v352
    %v1027 = vunpack.c.h.b16 %v352
    %v1028 = vunpack.c.l.b16 %v353
    %v1029 = vunpack.c.h.b16 %v353
    %v1030 = vunpack.c.l.b16 %v354
    %v1031 = vunpack.c.h.b16 %v354
    %v1032 = vunpack.c.l.b16 %v355
    %v1033 = vunpack.c.h.b16 %v355
    %v1034 = vunpack.c.l.b16 %v356
    %v1035 = vunpack.c.h.b16 %v356
    %v1036 = vunpack.c.l.b16 %v357
    %v1037 = vunpack.c.h.b16 %v357
    %v1038 = vunpack.c.l.b16 %v358
    %v1039 = vunpack.c.h.b16 %v358
    %v1040 = vunpack.c.l.b16 %v359
    %v1041 = vunpack.c.h.b16 %v359
    %v1042 = vunpack.c.l.b16 %v360
    %v1043 = vunpack.c.h.b16 %v360
    %v1044 = vunpack.c.l.b16 %v361
    %v1045 = vunpack.c.h.b16 %v361
    %v1046 = vunpack.c.l.b16 %v362
    %v1047 = vunpack.c.h.b16 %v362
    %v1048 = vunpack.c.l.b16 %v363
    %v1049 = vunpack.c.h.b16 %v363
    %v1050 = vunpack.c.l.b16 %v364
    %v1051 = vunpack.c.h.b16 %v364
    %v1052 = vunpack.c.l.b16 %v365
    %v1053 = vunpack.c.h.b16 %v365
    %v1054 = vunpack.c.l.b16 %v366
    %v1055 = vunpack.c.h.b16 %v366
    %v1056 = vunpack.c.l.b16 %v367
    %v1057 = vunpack.c.h.b16 %v367
    %v1058 = vunpack.c.l.b16 %v368
    %v1059 = vunpack.c.h.b16 %v368
    %v1060 = vunpack.c.l.b16 %v369
    %v1061 = vunpack.c.h.b16 %v369
    %v1062 = vunpack.c.l.b16 %v370
    %v1063 = vunpack.c.h.b16 %v370
    %v1064 = vunpack.c.l.b16 %v371
    %v1065 = vunpack.c.h.b16 %v371
    %v1066 = vunpack.c.l.b16 %v372
    %v1067 = vunpack.c.h.b16 %v372
    %v1068 = vunpack.c.l.b16 %v373
    %v1069 = vunpack.c.h.b16 %v373
    %v1070 = vunpack.c.l.b16 %v374
    %v1071 = vunpack.c.h.b16 %v374
    %v1072 = vunpack.c.l.b16 %v375
    %v1073 = vunpack.c.h.b16 %v375
    %v1074 = vunpack.c.l.b16 %v376
    %v1075 = vunpack.c.h.b16 %v376
    %v1076 = vunpack.c.l.b16 %v377
    %v1077 = vunpack.c.h.b16 %v377
    %v1078 = vunpack.c.l.b16 %v378
    %v1079 = vunpack.c.h.b16 %v378
    %v1080 = vunpack.c.l.b16 %v379
    %v1081 = vunpack.c.h.b16 %v379
    %v1082 = vunpack.c.l.b16 %v380
    %v1083 = vunpack.c.h.b16 %v380
    %v1084 = vunpack.c.l.b16 %v381
    %v1085 = vunpack.c.h.b16 %v381
    %v1086 = vunpack.c.l.b16 %v382
    %v1087 = vunpack.c.h.b16 %v382
    %v1088 = vunpack.c.l.b16 %v383
    %v1089 = vunpack.c.h.b16 %v383
    %v1090 = vunpack.c.l.b16 %v384
    %v1091 = vunpack.c.h.b16 %v384
    %v1092 = vunpack.c.l.b16 %v385
    %v1093 = vunpack.c.h.b16 %v385
    %v1094 = vunpack.c.l.b16 %v386
    %v1095 = vunpack.c.h.b16 %v386
    %v1096 = vunpack.c.l.b16 %v387
    %v1097 = vunpack.c.h.b16 %v387
    %v1098 = vunpack.c.l.b16 %v388
    %v1099 = vunpack.c.h.b16 %v388
    %v1100 = vunpack.c.l.b16 %v389
    %v1101 = vunpack.c.h.b16 %v389
    %v1102 = vunpack.c.l.b16 %v390
    %v1103 = vunpack.c.h.b16 %v390
    %v1104 = vunpack.c.l.b16 %v391
    %v1105 = vunpack.c.h.b16 %v391
    %v1106 = vunpack.c.l.b16 %v392
    %v1107 = vunpack.c.h.b16 %v392
    %v1108 = vunpack.c.l.b16 %v393
    %v1109 = vunpack.c.h.b16 %v393
    %v1110 = vunpack.c.l.b16 %v394
    %v1111 = vunpack.c.h.b16 %v394
    %v1112 = vunpack.c.l.b16 %v395
    %v1113 = vunpack.c.h.b16 %v395
    %v1114 = vunpack.c.l.b16 %v396
    %v1115 = vunpack.c.h.b16 %v396
    %v1116 = vunpack.c.l.b16 %v397
    %v1117 = vunpack.c.h.b16 %v397
    %v1118 = vunpack.c.l.b16 %v398
    %v1119 = vunpack.c.h.b16 %v398
    %v1120 = vunpack.c.l.b16 %v399
    %v1121 = vunpack.c.h.b16 %v399
    %v1122 = vunpack.c.l.b16 %v400
    %v1123 = vunpack.c.h.b16 %v400
    %v1124 = vunpack.c.l.b16 %v401
    %v1125 = vunpack.c.h.b16 %v401
    %v1126 = vunpack.c.l.b16 %v402
    %v1127 = vunpack.c.h.b16 %v402
    %v1128 = vunpack.c.l.b16 %v403
    %v1129 = vunpack.c.h.b16 %v403
    %v1130 = vunpack.c.l.b16 %v404
    %v1131 = vunpack.c.h.b16 %v404
    %v1132 = vunpack.c.l.b16 %v405
    %v1133 = vunpack.c.h.b16 %v405
    %v1134 = vunpack.c.l.b16 %v406
    %v1135 = vunpack.c.h.b16 %v406
    %v1136 = vunpack.c.l.b16 %v407
    %v1137 = vunpack.c.h.b16 %v407
    %v1138 = vunpack.c.l.b16 %v408
    %v1139 = vunpack.c.h.b16 %v408
    %v1140 = vunpack.c.l.b16 %v409
    %v1141 = vunpack.c.h.b16 %v409
    %v1142 = vunpack.c.l.b16 %v410
    %v1143 = vunpack.c.h.b16 %v410
    %v1144 = vunpack.c.l.b16 %v411
    %v1145 = vunpack.c.h.b16 %v411
    %v1146 = vunpack.c.l.b16 %v412
    %v1147 = vunpack.c.h.b16 %v412
    %v1148 = vunpack.c.l.b16 %v413
    %v1149 = vunpack.c.h.b16 %v413
    %v1150 = vunpack.c.l.b16 %v414
    %v1151 = vunpack.c.h.b16 %v414
    %v1152 = vunpack.c.l.b16 %v415
    %v1153 = vunpack.c.h.b16 %v415
    %v1154 = vunpack.c.l.b16 %v416
    %v1155 = vunpack.c.h.b16 %v416
    %v1156 = vunpack.c.l.b16 %v417
    %v1157 = vunpack.c.h.b16 %v417
    %v1158 = vunpack.c.l.b16 %v418
    %v1159 = vunpack.c.h.b16 %v418
    %v1160 = vunpack.c.l.b16 %v419
    %v1161 = vunpack.c.h.b16 %v419
    %v1162 = vunpack.c.l.b16 %v420
    %v1163 = vunpack.c.h.b16 %v420
    %v1164 = vunpack.c.l.b16 %v421
    %v1165 = vunpack.c.h.b16 %v421
    %v1166 = vunpack.c.l.b16 %v422
    %v1167 = vunpack.c.h.b16 %v422
    %v1168 = vunpack.c.l.b16 %v423
    %v1169 = vunpack.c.h.b16 %v423
    %v1170 = vunpack.c.l.b16 %v424
    %v1171 = vunpack.c.h.b16 %v424
    %v1172 = vunpack.c.l.b16 %v425
    %v1173 = vunpack.c.h.b16 %v425
    %v1174 = vunpack.c.l.b16 %v426
    %v1175 = vunpack.c.h.b16 %v426
    %v1176 = vunpack.c.l.b16 %v427
    %v1177 = vunpack.c.h.b16 %v427
    %v1178 = vunpack.c.l.b16 %v428
    %v1179 = vunpack.c.h.b16 %v428
    %v1180 = vunpack.c.l.b16 %v429
    %v1181 = vunpack.c.h.b16 %v429
    %v1182 = vunpack.c.l.b16 %v430
    %v1183 = vunpack.c.h.b16 %v430
    %v1184 = vunpack.c.l.b16 %v431
    %v1185 = vunpack.c.h.b16 %v431
    %v1186 = vunpack.c.l.b16 %v432
    %v1187 = vunpack.c.h.b16 %v432
    %v1188 = vunpack.c.l.b16 %v433
    %v1189 = vunpack.c.h.b16 %v433
    %v1190 = vunpack.c.l.b16 %v434
    %v1191 = vunpack.c.h.b16 %v434
    %v1192 = vunpack.c.l.b16 %v435
    %v1193 = vunpack.c.h.b16 %v435
    %v1194 = vunpack.c.l.b16 %v436
    %v1195 = vunpack.c.h.b16 %v436
    %v1196 = vunpack.c.l.b16 %v437
    %v1197 = vunpack.c.h.b16 %v437
    %v1198 = vunpack.c.l.b16 %v438
    %v1199 = vunpack.c.h.b16 %v438
    %v1200 = vunpack.c.l.b16 %v439
    %v1201 = vunpack.c.h.b16 %v439
    %v1202 = vunpack.c.l.b16 %v440
    %v1203 = vunpack.c.h.b16 %v440
    %v1204 = vunpack.c.l.b16 %v441
    %v1205 = vunpack.c.h.b16 %v441
    %v1206 = vunpack.c.l.b16 %v442
    %v1207 = vunpack.c.h.b16 %v442
    %v1208 = vunpack.c.l.b16 %v443
    %v1209 = vunpack.c.h.b16 %v443
    %v1210 = vunpack.c.l.b16 %v444
    %v1211 = vunpack.c.h.b16 %v444
    %v1212 = vunpack.c.l.b16 %v445
    %v1213 = vunpack.c.h.b16 %v445
    %v1214 = vunpack.c.l.b16 %v446
    %v1215 = vunpack.c.h.b16 %v446
    %v1216 = vunpack.c.l.b16 %v447
    %v1217 = vunpack.c.h.b16 %v447
    %v1218 = vunpack.c.l.b16 %v448
    %v1219 = vunpack.c.h.b16 %v448
    %v1220 = vunpack.c.l.b16 %v449
    %v1221 = vunpack.c.h.b16 %v449
    %v1222 = vunpack.c.l.b16 %v450
    %v1223 = vunpack.c.h.b16 %v450
    %v1224 = vunpack.c.l.b16 %v451
    %v1225 = vunpack.c.h.b16 %v451
    %v1226 = vunpack.c.l.b16 %v452
    %v1227 = vunpack.c.h.b16 %v452
    %v1228 = vunpack.c.l.b16 %v453
    %v1229 = vunpack.c.h.b16 %v453
    %v1230 = vunpack.c.l.b16 %v454
    %v1231 = vunpack.c.h.b16 %v454
    %v1232 = vunpack.c.l.b16 %v455
    %v1233 = vunpack.c.h.b16 %v455
    %v1234 = vunpack.c.l.b16 %v456
    %v1235 = vunpack.c.h.b16 %v456
    %v1236 = vunpack.c.l.b16 %v457
    %v1237 = vunpack.c.h.b16 %v457
    %v1238 = vunpack.c.l.b16 %v458
    %v1239 = vunpack.c.h.b16 %v458
    %v1240 = vunpack.c.l.b16 %v459
    %v1241 = vunpack.c.h.b16 %v459
    %v1242 = vunpack.c.l.b16 %v460
    %v1243 = vunpack.c.h.b16 %v460
    %v1244 = vunpack.c.l.b16 %v461
    %v1245 = vunpack.c.h.b16 %v461
    %v1246 = vunpack.c.l.b16 %v462
    %v1247 = vunpack.c.h.b16 %v462
    %v1248 = vunpack.c.l.b16 %v463
    %v1249 = vunpack.c.h.b16 %v463
    %v1250 = vunpack.c.l.b16 %v464
    %v1251 = vunpack.c.h.b16 %v464
    %v1252 = vunpack.c.l.b16 %v465
    %v1253 = vunpack.c.h.b16 %v465
    %v1254 = vunpack.c.l.b16 %v466
    %v1255 = vunpack.c.h.b16 %v466
    %v1256 = vunpack.c.l.b16 %v467
    %v1257 = vunpack.c.h.b16 %v467
    %v1258 = vpack.c.b16 %v750, %v746
    %v1259 = vpack.c.b16 %v751, %v747
    %v1260 = vpack.c.b16 %v752, %v748
    %v1261 = vpack.c.b16 %v753, %v749
    %v1262 = vpack.c.b16 %v758, %v754
    %v1263 = vpack.c.b16 %v759, %v755
    %v1264 = vpack.c.b16 %v760, %v756
    %v1265 = vpack.c.b16 %v761, %v757
    %v1266 = vpack.c.b16 %v766, %v762
    %v1267 = vpack.c.b16 %v767, %v763
    %v1268 = vpack.c.b16 %v768, %v764
    %v1269 = vpack.c.b16 %v769, %v765
    %v1270 = vpack.c.b16 %v774, %v770
    %v1271 = vpack.c.b16 %v775, %v771
    %v1272 = vpack.c.b16 %v776, %v772
    %v1273 = vpack.c.b16 %v777, %v773
    %v1274 = vpack.c.b16 %v782, %v778
    %v1275 = vpack.c.b16 %v783, %v779
    %v1276 = vpack.c.b16 %v784, %v780
    %v1277 = vpack.c.b16 %v785, %v781
    %v1278 = vpack.c.b16 %v790, %v786
    %v1279 = vpack.c.b16 %v791, %v787
    %v1280 = vpack.c.b16 %v792, %v788
    %v1281 = vpack.c.b16 %v793, %v789
    %v1282 = vpack.c.b16 %v798, %v794
    %v1283 = vpack.c.b16 %v799, %v795
    %v1284 = vpack.c.b16 %v800, %v796
    %v1285 = vpack.c.b16 %v801, %v797
    %v1286 = vpack.c.b16 %v806, %v802
    %v1287 = vpack.c.b16 %v807, %v803
    %v1288 = vpack.c.b16 %v808, %v804
    %v1289 = vpack.c.b16 %v809, %v805
    %v1290 = vpack.c.b16 %v814, %v810
    %v1291 = vpack.c.b16 %v815, %v811
    %v1292 = vpack.c.b16 %v816, %v812
    %v1293 = vpack.c.b16 %v817, %v813
    %v1294 = vpack.c.b16 %v822, %v818
    %v1295 = vpack.c.b16 %v823, %v819
    %v1296 = vpack.c.b16 %v824, %v820
    %v1297 = vpack.c.b16 %v825, %v821
    %v1298 = vpack.c.b16 %v830, %v826
    %v1299 = vpack.c.b16 %v831, %v827
    %v1300 = vpack.c.b16 %v832, %v828
    %v1301 = vpack.c.b16 %v833, %v829
    %v1302 = vpack.c.b16 %v838, %v834
    %v1303 = vpack.c.b16 %v839, %v835
    %v1304 = vpack.c.b16 %v840, %v836
    %v1305 = vpack.c.b16 %v841, %v837
    %v1306 = vpack.c.b16 %v846, %v842
    %v1307 = vpack.c.b16 %v847, %v843
    %v1308 = vpack.c.b16 %v848, %v844
    %v1309 = vpack.c.b16 %v849, %v845
    %v1310 = vpack.c.b16 %v854, %v850
    %v1311 = vpack.c.b16 %v855, %v851
    %v1312 = vpack.c.b16 %v856, %v852
    %v1313 = vpack.c.b16 %v857, %v853
    %v1314 = vpack.c.b16 %v862, %v858
    %v1315 = vpack.c.b16 %v863, %v859
    %v1316 = vpack.c.b16 %v864, %v860
    %v1317 = vpack.c.b16 %v865, %v861
    %v1318 = vpack.c.b16 %v870, %v866
    %v1319 = vpack.c.b16 %v871, %v867
    %v1320 = vpack.c.b16 %v872, %v868
    %v1321 = vpack.c.b16 %v873, %v869
    %v1322 = vpack.c.b16 %v878, %v874
    %v1323 = vpack.c.b16 %v879, %v875
    %v1324 = vpack.c.b16 %v880, %v876
    %v1325 = vpack.c.b16 %v881, %v877
    %v1326 = vpack.c.b16 %v886, %v882
    %v1327 = vpack.c.b16 %v887, %v883
    %v1328 = vpack.c.b16 %v888, %v884
    %v1329 = vpack.c.b16 %v889, %v885
    %v1330 = vpack.c.b16 %v894, %v890
    %v1331 = vpack.c.b16 %v895, %v891
    %v1332 = vpack.c.b16 %v896, %v892
    %v1333 = vpack.c.b16 %v897, %v893
    %v1334 = vpack.c.b16 %v902, %v898
    %v1335 = vpack.c.b16 %v903, %v899
    %v1336 = vpack.c.b16 %v904, %v900
    %v1337 = vpack.c.b16 %v905, %v901
    %v1338 = vpack.c.b16 %v910, %v906
    %v1339 = vpack.c.b16 %v911, %v907
    %v1340 = vpack.c.b16 %v912, %v908
    %v1341 = vpack.c.b16 %v913, %v909
    %v1342 = vpack.c.b16 %v918, %v914
    %v1343 = vpack.c.b16 %v919, %v915
    %v1344 = vpack.c.b16 %v920, %v916
    %v1345 = vpack.c.b16 %v921, %v917
    %v1346 = vpack.c.b16 %v926, %v922
    %v1347 = vpack.c.b16 %v927, %v923
    %v1348 = vpack.c.b16 %v928, %v924
    %v1349 = vpack.c.b16 %v929, %v925
    %v1350 = vpack.c.b16 %v934, %v930
    %v1351 = vpack.c.b16 %v935, %v931
    %v1352 = vpack.c.b16 %v936, %v932
    %v1353 = vpack.c.b16 %v937, %v933
    %v1354 = vpack.c.b16 %v942, %v938
    %v1355 = vpack.c.b16 %v943, %v939
    %v1356 = vpack.c.b16 %v944, %v940
    %v1357 = vpack.c.b16 %v945, %v941
    %v1358 = vpack.c.b16 %v950, %v946
    %v1359 = vpack.c.b16 %v951, %v947
    %v1360 = vpack.c.b16 %v952, %v948
    %v1361 = vpack.c.b16 %v953, %v949
    %v1362 = vpack.c.b16 %v958, %v954
    %v1363 = vpack.c.b16 %v959, %v955
    %v1364 = vpack.c.b16 %v960, %v956
    %v1365 = vpack.c.b16 %v961, %v957
    %v1366 = vpack.c.b16 %v966, %v962
    %v1367 = vpack.c.b16 %v967, %v963
    %v1368 = vpack.c.b16 %v968, %v964
    %v1369 = vpack.c.b16 %v969, %v965
    %v1370 = vpack.c.b16 %v974, %v970
    %v1371 = vpack.c.b16 %v975, %v971
    %v1372 = vpack.c.b16 %v976, %v972
    %v1373 = vpack.c.b16 %v977, %v973
    %v1374 = vpack.c.b16 %v982, %v978
    %v1375 = vpack.c.b16 %v983, %v979
    %v1376 = vpack.c.b16 %v984, %v980
    %v1377 = vpack.c.b16 %v985, %v981
    %v1378 = vpack.c.b16 %v990, %v986
    %v1379 = vpack.c.b16 %v991, %v987
    %v1380 = vpack.c.b16 %v992, %v988
    %v1381 = vpack.c.b16 %v993, %v989
    %v1382 = vpack.c.b16 %v998, %v994
    %v1383 = vpack.c.b16 %v999, %v995
    %v1384 = vpack.c.b16 %v1000, %v996
    %v1385 = vpack.c.b16 %v1001, %v997
    %v1386 = vpack.c.b16 %v1006, %v1002
    %v1387 = vpack.c.b16 %v1007, %v1003
    %v1388 = vpack.c.b16 %v1008, %v1004
    %v1389 = vpack.c.b16 %v1009, %v1005
    %v1390 = vpack.c.b16 %v1014, %v1010
    %v1391 = vpack.c.b16 %v1015, %v1011
    %v1392 = vpack.c.b16 %v1016, %v1012
    %v1393 = vpack.c.b16 %v1017, %v1013
    %v1394 = vpack.c.b16 %v1022, %v1018
    %v1395 = vpack.c.b16 %v1023, %v1019
    %v1396 = vpack.c.b16 %v1024, %v1020
    %v1397 = vpack.c.b16 %v1025, %v1021
    %v1398 = vpack.c.b16 %v1030, %v1026
    %v1399 = vpack.c.b16 %v1031, %v1027
    %v1400 = vpack.c.b16 %v1032, %v1028
    %v1401 = vpack.c.b16 %v1033, %v1029
    %v1402 = vpack.c.b16 %v1038, %v1034
    %v1403 = vpack.c.b16 %v1039, %v1035
    %v1404 = vpack.c.b16 %v1040, %v1036
    %v1405 = vpack.c.b16 %v1041, %v1037
    %v1406 = vpack.c.b16 %v1046, %v1042
    %v1407 = vpack.c.b16 %v1047, %v1043
    %v1408 = vpack.c.b16 %v1048, %v1044
    %v1409 = vpack.c.b16 %v1049, %v1045
    %v1410 = vpack.c.b16 %v1054, %v1050
    %v1411 = vpack.c.b16 %v1055, %v1051
    %v1412 = vpack.c.b16 %v1056, %v1052
    %v1413 = vpack.c.b16 %v1057, %v1053
    %v1414 = vpack.c.b16 %v1062, %v1058
    %v1415 = vpack.c.b16 %v1063, %v1059
    %v1416 = vpack.c.b16 %v1064, %v1060
    %v1417 = vpack.c.b16 %v1065, %v1061
    %v1418 = vpack.c.b16 %v1070, %v1066
    %v1419 = vpack.c.b16 %v1071, %v1067
    %v1420 = vpack.c.b16 %v1072, %v1068
    %v1421 = vpack.c.b16 %v1073, %v1069
    %v1422 = vpack.c.b16 %v1078, %v1074
    %v1423 = vpack.c.b16 %v1079, %v1075
    %v1424 = vpack.c.b16 %v1080, %v1076
    %v1425 = vpack.c.b16 %v1081, %v1077
    %v1426 = vpack.c.b16 %v1086, %v1082
    %v1427 = vpack.c.b16 %v1087, %v1083
    %v1428 = vpack.c.b16 %v1088, %v1084
    %v1429 = vpack.c.b16 %v1089, %v1085
    %v1430 = vpack.c.b16 %v1094, %v1090
    %v1431 = vpack.c.b16 %v1095, %v1091
    %v1432 = vpack.c.b16 %v1096, %v1092
    %v1433 = vpack.c.b16 %v1097, %v1093
    %v1434 = vpack.c.b16 %v1102, %v1098
    %v1435 = vpack.c.b16 %v1103, %v1099
    %v1436 = vpack.c.b16 %v1104, %v1100
    %v1437 = vpack.c.b16 %v1105, %v1101
    %v1438 = vpack.c.b16 %v1110, %v1106
    %v1439 = vpack.c.b16 %v1111, %v1107
    %v1440 = vpack.c.b16 %v1112, %v1108
    %v1441 = vpack.c.b16 %v1113, %v1109
    %v1442 = vpack.c.b16 %v1118, %v1114
    %v1443 = vpack.c.b16 %v1119, %v1115
    %v1444 = vpack.c.b16 %v1120, %v1116
    %v1445 = vpack.c.b16 %v1121, %v1117
    %v1446 = vpack.c.b16 %v1126, %v1122
    %v1447 = vpack.c.b16 %v1127, %v1123
    %v1448 = vpack.c.b16 %v1128, %v1124
    %v1449 = vpack.c.b16 %v1129, %v1125
    %v1450 = vpack.c.b16 %v1134, %v1130
    %v1451 = vpack.c.b16 %v1135, %v1131
    %v1452 = vpack.c.b16 %v1136, %v1132
    %v1453 = vpack.c.b16 %v1137, %v1133
    %v1454 = vpack.c.b16 %v1142, %v1138
    %v1455 = vpack.c.b16 %v1143, %v1139
    %v1456 = vpack.c.b16 %v1144, %v1140
    %v1457 = vpack.c.b16 %v1145, %v1141
    %v1458 = vpack.c.b16 %v1150, %v1146
    %v1459 = vpack.c.b16 %v1151, %v1147
    %v1460 = vpack.c.b16 %v1152, %v1148
    %v1461 = vpack.c.b16 %v1153, %v1149
    %v1462 = vpack.c.b16 %v1158, %v1154
    %v1463 = vpack.c.b16 %v1159, %v1155
    %v1464 = vpack.c.b16 %v1160, %v1156
    %v1465 = vpack.c.b16 %v1161, %v1157
    %v1466 = vpack.c.b16 %v1166, %v1162
    %v1467 = vpack.c.b16 %v1167, %v1163
    %v1468 = vpack.c.b16 %v1168, %v1164
    %v1469 = vpack.c.b16 %v1169, %v1165
    %v1470 = vpack.c.b16 %v1174, %v1170
    %v1471 = vpack.c.b16 %v1175, %v1171
    %v1472 = vpack.c.b16 %v1176, %v1172
    %v1473 = vpack.c.b16 %v1177, %v1173
    %v1474 = vpack.c.b16 %v1182, %v1178
    %v1475 = vpack.c.b16 %v1183, %v1179
    %v1476 = vpack.c.b16 %v1184, %v1180
    %v1477 = vpack.c.b16 %v1185, %v1181
    %v1478 = vpack.c.b16 %v1190, %v1186
    %v1479 = vpack.c.b16 %v1191, %v1187
    %v1480 = vpack.c.b16 %v1192, %v1188
    %v1481 = vpack.c.b16 %v1193, %v1189
    %v1482 = vpack.c.b16 %v1198, %v1194
    %v1483 = vpack.c.b16 %v1199, %v1195
    %v1484 = vpack.c.b16 %v1200, %v1196
    %v1485 = vpack.c.b16 %v1201, %v1197
    %v1486 = vpack.c.b16 %v1206, %v1202
    %v1487 = vpack.c.b16 %v1207, %v1203
    %v1488 = vpack.c.b16 %v1208, %v1204
    %v1489 = vpack.c.b16 %v1209, %v1205
    %v1490 = vpack.c.b16 %v1214, %v1210
    %v1491 = vpack.c.b16 %v1215, %v1211
    %v1492 = vpack.c.b16 %v1216, %v1212
    %v1493 = vpack.c.b16 %v1217, %v1213
    %v1494 = vpack.c.b16 %v1222, %v1218
    %v1495 = vpack.c.b16 %v1223, %v1219
    %v1496 = vpack.c.b16 %v1224, %v1220
    %v1497 = vpack.c.b16 %v1225, %v1221
    %v1498 = vpack.c.b16 %v1230, %v1226
    %v1499 = vpack.c.b16 %v1231, %v1227
    %v1500 = vpack.c.b16 %v1232, %v1228
    %v1501 = vpack.c.b16 %v1233, %v1229
    %v1502 = vpack.c.b16 %v1238, %v1234
    %v1503 = vpack.c.b16 %v1239, %v1235
    %v1504 = vpack.c.b16 %v1240, %v1236
    %v1505 = vpack.c.b16 %v1241, %v1237
    %v1506 = vpack.c.b16 %v1246, %v1242
    %v1507 = vpack.c.b16 %v1247, %v1243
    %v1508 = vpack.c.b16 %v1248, %v1244
    %v1509 = vpack.c.b16 %v1249, %v1245
    %v1510 = vpack.c.b16 %v1254, %v1250
    %v1511 = vpack.c.b16 %v1255, %v1251
    %v1512 = vpack.c.b16 %v1256, %v1252
    %v1513 = vpack.c.b16 %v1257, %v1253
    %1770 = vmatprep.subr.bf16.mxu0 %v1259
    %1771 = vmatpush1.bf16.msra.mxu0 %v1258
    %1772 = vmatprep.subr.bf16.mxu0 %v1263
    %1773 = vmatpush1.bf16.msra.mxu0 %v1262
    %1774 = vmatprep.subr.bf16.mxu0 %v1267
    %1775 = vmatpush1.bf16.msra.mxu0 %v1266
    %1776 = vmatprep.subr.bf16.mxu0 %v1271
    %1777 = vmatpush1.bf16.msra.mxu0 %v1270
    %1778 = vmatprep.subr.bf16.mxu0 %v1275
    %1779 = vmatpush1.bf16.msra.mxu0 %v1274
    %1780 = vmatprep.subr.bf16.mxu0 %v1279
    %1781 = vmatpush1.bf16.msra.mxu0 %v1278
    %1782 = vmatprep.subr.bf16.mxu0 %v1283
    %1783 = vmatpush1.bf16.msra.mxu0 %v1282
    %1784 = vmatprep.subr.bf16.mxu0 %v1287
    %1785 = vmatpush1.bf16.msra.mxu0 %v1286
    %1786 = vmatprep.subr.bf16.mxu0 %v1291
    %1787 = vmatpush1.bf16.msra.mxu0 %v1290
    %1788 = vmatprep.subr.bf16.mxu0 %v1295
    %1789 = vmatpush1.bf16.msra.mxu0 %v1294
    %1790 = vmatprep.subr.bf16.mxu0 %v1299
    %1791 = vmatpush1.bf16.msra.mxu0 %v1298
    %1792 = vmatprep.subr.bf16.mxu0 %v1303
    %1793 = vmatpush1.bf16.msra.mxu0 %v1302
    %1794 = vmatprep.subr.bf16.mxu0 %v1307
    %1795 = vmatpush1.bf16.msra.mxu0 %v1306
    %1796 = vmatprep.subr.bf16.mxu0 %v1311
    %1797 = vmatpush1.bf16.msra.mxu0 %v1310
    %1798 = vmatprep.subr.bf16.mxu0 %v1315
    %1799 = vmatpush1.bf16.msra.mxu0 %v1314
    %1800 = vmatprep.subr.bf16.mxu0 %v1319
    %1801 = vmatpush1.bf16.msra.mxu0 %v1318
    %1802 = vmatprep.mubr.bf16.mxu0 %v205
    %1803 = vmatmul.mubr.bf16.gmra.mrb[0].mxu0 %v204
    %v1804 = vpop.f32.mrb[0].mxu0
    %v1805 = vadd.f32 %v473, %v1804
    %v1806 = vpop.f32.mrb[0].mxu0
    %v1807 = vadd.f32 %v477, %v1806
    %v1808 = vpop.f32.mrb[0].mxu0
    %v1809 = vpop.f32.mrb[0].mxu0
    %1810 = vdwg.mxu0
    %1811 = vmatprep.subr.bf16.mxu0 %v1323
    %1812 = vmatpush1.bf16.msra.mxu0 %v1322
    %1813 = vmatprep.subr.bf16.mxu0 %v1327
    %1814 = vmatpush1.bf16.msra.mxu0 %v1326
    %1815 = vmatprep.subr.bf16.mxu0 %v1331
    %1816 = vmatpush1.bf16.msra.mxu0 %v1330
    %1817 = vmatprep.subr.bf16.mxu0 %v1335
    %1818 = vmatpush1.bf16.msra.mxu0 %v1334
    %1819 = vmatprep.subr.bf16.mxu0 %v1339
    %1820 = vmatpush1.bf16.msra.mxu0 %v1338
    %1821 = vmatprep.subr.bf16.mxu0 %v1343
    %1822 = vmatpush1.bf16.msra.mxu0 %v1342
    %1823 = vmatprep.subr.bf16.mxu0 %v1347
    %1824 = vmatpush1.bf16.msra.mxu0 %v1346
    %1825 = vmatprep.subr.bf16.mxu0 %v1351
    %1826 = vmatpush1.bf16.msra.mxu0 %v1350
    %1827 = vmatprep.subr.bf16.mxu0 %v1355
    %1828 = vmatpush1.bf16.msra.mxu0 %v1354
    %1829 = vmatprep.subr.bf16.mxu0 %v1359
    %1830 = vmatpush1.bf16.msra.mxu0 %v1358
    %1831 = vmatprep.subr.bf16.mxu0 %v1363
    %1832 = vmatpush1.bf16.msra.mxu0 %v1362
    %1833 = vmatprep.subr.bf16.mxu0 %v1367
    %1834 = vmatpush1.bf16.msra.mxu0 %v1366
    %1835 = vmatprep.subr.bf16.mxu0 %v1371
    %1836 = vmatpush1.bf16.msra.mxu0 %v1370
    %1837 = vmatprep.subr.bf16.mxu0 %v1375
    %1838 = vmatpush1.bf16.msra.mxu0 %v1374
    %1839 = vmatprep.subr.bf16.mxu0 %v1379
    %1840 = vmatpush1.bf16.msra.mxu0 %v1378
    %1841 = vmatprep.subr.bf16.mxu0 %v1383
    %1842 = vmatpush1.bf16.msra.mxu0 %v1382
    %1843 = vmatprep.mubr.bf16.mxu0 %v207
    %1844 = vmatmul.mubr.bf16.gmra.mrb[0].mxu0 %v206
    %v1845 = vpop.f32.mrb[0].mxu0
    %v1846 = vadd.f32 %v1805, %v1845
    %v1847 = vpop.f32.mrb[0].mxu0
    %v1848 = vadd.f32 %v1807, %v1847
    %v1849 = vpop.f32.mrb[0].mxu0
    %v1850 = vpop.f32.mrb[0].mxu0
    %1851 = vdwg.mxu0
    %1852 = vmatprep.subr.bf16.mxu0 %v1387
    %1853 = vmatpush1.bf16.msra.mxu0 %v1386
    %1854 = vmatprep.subr.bf16.mxu0 %v1391
    %1855 = vmatpush1.bf16.msra.mxu0 %v1390
    %1856 = vmatprep.subr.bf16.mxu0 %v1395
    %1857 = vmatpush1.bf16.msra.mxu0 %v1394
    %1858 = vmatprep.subr.bf16.mxu0 %v1399
    %1859 = vmatpush1.bf16.msra.mxu0 %v1398
    %1860 = vmatprep.subr.bf16.mxu0 %v1403
    %1861 = vmatpush1.bf16.msra.mxu0 %v1402
    %1862 = vmatprep.subr.bf16.mxu0 %v1407
    %1863 = vmatpush1.bf16.msra.mxu0 %v1406
    %1864 = vmatprep.subr.bf16.mxu0 %v1411
    %1865 = vmatpush1.bf16.msra.mxu0 %v1410
    %1866 = vmatprep.subr.bf16.mxu0 %v1415
    %1867 = vmatpush1.bf16.msra.mxu0 %v1414
    %1868 = vmatprep.subr.bf16.mxu0 %v1419
    %1869 = vmatpush1.bf16.msra.mxu0 %v1418
    %1870 = vmatprep.subr.bf16.mxu0 %v1423
    %1871 = vmatpush1.bf16.msra.mxu0 %v1422
    %1872 = vmatprep.subr.bf16.mxu0 %v1427
    %1873 = vmatpush1.bf16.msra.mxu0 %v1426
    %1874 = vmatprep.subr.bf16.mxu0 %v1431
    %1875 = vmatpush1.bf16.msra.mxu0 %v1430
    %1876 = vmatprep.subr.bf16.mxu0 %v1435
    %1877 = vmatpush1.bf16.msra.mxu0 %v1434
    %1878 = vmatprep.subr.bf16.mxu0 %v1439
    %1879 = vmatpush1.bf16.msra.mxu0 %v1438
    %1880 = vmatprep.subr.bf16.mxu0 %v1443
    %1881 = vmatpush1.bf16.msra.mxu0 %v1442
    %1882 = vmatprep.subr.bf16.mxu0 %v1447
    %1883 = vmatpush1.bf16.msra.mxu0 %v1446
    %1884 = vmatprep.mubr.bf16.mxu0 %v209
    %1885 = vmatmul.mubr.bf16.gmra.mrb[0].mxu0 %v208
    %v1886 = vpop.f32.mrb[0].mxu0
    %v1887 = vadd.f32 %v1846, %v1886
    %v1888 = vpop.f32.mrb[0].mxu0
    %v1889 = vadd.f32 %v1848, %v1888
    %v1890 = vpop.f32.mrb[0].mxu0
    %v1891 = vpop.f32.mrb[0].mxu0
    %1892 = vdwg.mxu0
    %1893 = vmatprep.subr.bf16.mxu0 %v1451
    %1894 = vmatpush1.bf16.msra.mxu0 %v1450
    %1895 = vmatprep.subr.bf16.mxu0 %v1455
    %1896 = vmatpush1.bf16.msra.mxu0 %v1454
    %1897 = vmatprep.subr.bf16.mxu0 %v1459
    %1898 = vmatpush1.bf16.msra.mxu0 %v1458
    %1899 = vmatprep.subr.bf16.mxu0 %v1463
    %1900 = vmatpush1.bf16.msra.mxu0 %v1462
    %1901 = vmatprep.subr.bf16.mxu0 %v1467
    %1902 = vmatpush1.bf16.msra.mxu0 %v1466
    %1903 = vmatprep.subr.bf16.mxu0 %v1471
    %1904 = vmatpush1.bf16.msra.mxu0 %v1470
    %1905 = vmatprep.subr.bf16.mxu0 %v1475
    %1906 = vmatpush1.bf16.msra.mxu0 %v1474
    %1907 = vmatprep.subr.bf16.mxu0 %v1479
    %1908 = vmatpush1.bf16.msra.mxu0 %v1478
    %1909 = vmatprep.subr.bf16.mxu0 %v1483
    %1910 = vmatpush1.bf16.msra.mxu0 %v1482
    %1911 = vmatprep.subr.bf16.mxu0 %v1487
    %1912 = vmatpush1.bf16.msra.mxu0 %v1486
    %1913 = vmatprep.subr.bf16.mxu0 %v1491
    %1914 = vmatpush1.bf16.msra.mxu0 %v1490
    %1915 = vmatprep.subr.bf16.mxu0 %v1495
    %1916 = vmatpush1.bf16.msra.mxu0 %v1494
    %1917 = vmatprep.subr.bf16.mxu0 %v1499
    %1918 = vmatpush1.bf16.msra.mxu0 %v1498
    %1919 = vmatprep.subr.bf16.mxu0 %v1503
    %1920 = vmatpush1.bf16.msra.mxu0 %v1502
    %1921 = vmatprep.subr.bf16.mxu0 %v1507
    %1922 = vmatpush1.bf16.msra.mxu0 %v1506
    %1923 = vmatprep.subr.bf16.mxu0 %v1511
    %1924 = vmatpush1.bf16.msra.mxu0 %v1510
    %1925 = vmatprep.mubr.bf16.mxu0 %v211
    %1926 = vmatmul.mubr.bf16.gmra.mrb[0].mxu0 %v210
    %v1927 = vpop.f32.mrb[0].mxu0
    %v1928 = vadd.f32 %v1887, %v1927
    %v1929 = vpop.f32.mrb[0].mxu0
    %v1930 = vadd.f32 %v1889, %v1929
    %v1931 = vpop.f32.mrb[0].mxu0
    %v1932 = vpop.f32.mrb[0].mxu0
    %1933 = vdwg.mxu0
    %1934 = vmatprep.subr.bf16.mxu0 %v1261
    %1935 = vmatpush1.bf16.msra.mxu0 %v1260
    %1936 = vmatprep.subr.bf16.mxu0 %v1265
    %1937 = vmatpush1.bf16.msra.mxu0 %v1264
    %1938 = vmatprep.subr.bf16.mxu0 %v1269
    %1939 = vmatpush1.bf16.msra.mxu0 %v1268
    %1940 = vmatprep.subr.bf16.mxu0 %v1273
    %1941 = vmatpush1.bf16.msra.mxu0 %v1272
    %1942 = vmatprep.subr.bf16.mxu0 %v1277
    %1943 = vmatpush1.bf16.msra.mxu0 %v1276
    %1944 = vmatprep.subr.bf16.mxu0 %v1281
    %1945 = vmatpush1.bf16.msra.mxu0 %v1280
    %1946 = vmatprep.subr.bf16.mxu0 %v1285
    %1947 = vmatpush1.bf16.msra.mxu0 %v1284
    %1948 = vmatprep.subr.bf16.mxu0 %v1289
    %1949 = vmatpush1.bf16.msra.mxu0 %v1288
    %1950 = vmatprep.subr.bf16.mxu0 %v1293
    %1951 = vmatpush1.bf16.msra.mxu0 %v1292
    %1952 = vmatprep.subr.bf16.mxu0 %v1297
    %1953 = vmatpush1.bf16.msra.mxu0 %v1296
    %1954 = vmatprep.subr.bf16.mxu0 %v1301
    %1955 = vmatpush1.bf16.msra.mxu0 %v1300
    %1956 = vmatprep.subr.bf16.mxu0 %v1305
    %1957 = vmatpush1.bf16.msra.mxu0 %v1304
    %1958 = vmatprep.subr.bf16.mxu0 %v1309
    %1959 = vmatpush1.bf16.msra.mxu0 %v1308
    %1960 = vmatprep.subr.bf16.mxu0 %v1313
    %1961 = vmatpush1.bf16.msra.mxu0 %v1312
    %1962 = vmatprep.subr.bf16.mxu0 %v1317
    %1963 = vmatpush1.bf16.msra.mxu0 %v1316
    %1964 = vmatprep.subr.bf16.mxu0 %v1321
    %1965 = vmatpush1.bf16.msra.mxu0 %v1320
    %1966 = vmatprep.mubr.bf16.mxu0 %v205
    %1967 = vmatmul.mubr.bf16.gmra.mrb[0].mxu0 %v204
    %v1968 = vpop.f32.mrb[0].mxu0
    %v1969 = vadd.f32 %v481, %v1968
    %v1970 = vpop.f32.mrb[0].mxu0
    %v1971 = vadd.f32 %v485, %v1970
    %v1972 = vpop.f32.mrb[0].mxu0
    %v1973 = vpop.f32.mrb[0].mxu0
    %1974 = vdwg.mxu0
    %1975 = vmatprep.subr.bf16.mxu0 %v1325
    %1976 = vmatpush1.bf16.msra.mxu0 %v1324
    %1977 = vmatprep.subr.bf16.mxu0 %v1329
    %1978 = vmatpush1.bf16.msra.mxu0 %v1328
    %1979 = vmatprep.subr.bf16.mxu0 %v1333
    %1980 = vmatpush1.bf16.msra.mxu0 %v1332
    %1981 = vmatprep.subr.bf16.mxu0 %v1337
    %1982 = vmatpush1.bf16.msra.mxu0 %v1336
    %1983 = vmatprep.subr.bf16.mxu0 %v1341
    %1984 = vmatpush1.bf16.msra.mxu0 %v1340
    %1985 = vmatprep.subr.bf16.mxu0 %v1345
    %1986 = vmatpush1.bf16.msra.mxu0 %v1344
    %1987 = vmatprep.subr.bf16.mxu0 %v1349
    %1988 = vmatpush1.bf16.msra.mxu0 %v1348
    %1989 = vmatprep.subr.bf16.mxu0 %v1353
    %1990 = vmatpush1.bf16.msra.mxu0 %v1352
    %1991 = vmatprep.subr.bf16.mxu0 %v1357
    %1992 = vmatpush1.bf16.msra.mxu0 %v1356
    %1993 = vmatprep.subr.bf16.mxu0 %v1361
    %1994 = vmatpush1.bf16.msra.mxu0 %v1360
    %1995 = vmatprep.subr.bf16.mxu0 %v1365
    %1996 = vmatpush1.bf16.msra.mxu0 %v1364
    %1997 = vmatprep.subr.bf16.mxu0 %v1369
    %1998 = vmatpush1.bf16.msra.mxu0 %v1368
    %1999 = vmatprep.subr.bf16.mxu0 %v1373
    %2000 = vmatpush1.bf16.msra.mxu0 %v1372
    %2001 = vmatprep.subr.bf16.mxu0 %v1377
    %2002 = vmatpush1.bf16.msra.mxu0 %v1376
    %2003 = vmatprep.subr.bf16.mxu0 %v1381
    %2004 = vmatpush1.bf16.msra.mxu0 %v1380
    %2005 = vmatprep.subr.bf16.mxu0 %v1385
    %2006 = vmatpush1.bf16.msra.mxu0 %v1384
    %2007 = vmatprep.mubr.bf16.mxu0 %v207
    %2008 = vmatmul.mubr.bf16.gmra.mrb[0].mxu0 %v206
    %v2009 = vpop.f32.mrb[0].mxu0
    %v2010 = vadd.f32 %v1969, %v2009
    %v2011 = vpop.f32.mrb[0].mxu0
    %v2012 = vadd.f32 %v1971, %v2011
    %v2013 = vpop.f32.mrb[0].mxu0
    %v2014 = vpop.f32.mrb[0].mxu0
    %2015 = vdwg.mxu0
    %2016 = vmatprep.subr.bf16.mxu0 %v1389
    %2017 = vmatpush1.bf16.msra.mxu0 %v1388
    %2018 = vmatprep.subr.bf16.mxu0 %v1393
    %2019 = vmatpush1.bf16.msra.mxu0 %v1392
    %2020 = vmatprep.subr.bf16.mxu0 %v1397
    %2021 = vmatpush1.bf16.msra.mxu0 %v1396
    %2022 = vmatprep.subr.bf16.mxu0 %v1401
    %2023 = vmatpush1.bf16.msra.mxu0 %v1400
    %2024 = vmatprep.subr.bf16.mxu0 %v1405
    %2025 = vmatpush1.bf16.msra.mxu0 %v1404
    %2026 = vmatprep.subr.bf16.mxu0 %v1409
    %2027 = vmatpush1.bf16.msra.mxu0 %v1408
    %2028 = vmatprep.subr.bf16.mxu0 %v1413
    %2029 = vmatpush1.bf16.msra.mxu0 %v1412
    %2030 = vmatprep.subr.bf16.mxu0 %v1417
    %2031 = vmatpush1.bf16.msra.mxu0 %v1416
    %2032 = vmatprep.subr.bf16.mxu0 %v1421
    %2033 = vmatpush1.bf16.msra.mxu0 %v1420
    %2034 = vmatprep.subr.bf16.mxu0 %v1425
    %2035 = vmatpush1.bf16.msra.mxu0 %v1424
    %2036 = vmatprep.subr.bf16.mxu0 %v1429
    %2037 = vmatpush1.bf16.msra.mxu0 %v1428
    %2038 = vmatprep.subr.bf16.mxu0 %v1433
    %2039 = vmatpush1.bf16.msra.mxu0 %v1432
    %2040 = vmatprep.subr.bf16.mxu0 %v1437
    %2041 = vmatpush1.bf16.msra.mxu0 %v1436
    %2042 = vmatprep.subr.bf16.mxu0 %v1441
    %2043 = vmatpush1.bf16.msra.mxu0 %v1440
    %2044 = vmatprep.subr.bf16.mxu0 %v1445
    %2045 = vmatpush1.bf16.msra.mxu0 %v1444
    %2046 = vmatprep.subr.bf16.mxu0 %v1449
    %2047 = vmatpush1.bf16.msra.mxu0 %v1448
    %2048 = vmatprep.mubr.bf16.mxu0 %v209
    %2049 = vmatmul.mubr.bf16.gmra.mrb[0].mxu0 %v208
    %v2050 = vpop.f32.mrb[0].mxu0
    %v2051 = vadd.f32 %v2010, %v2050
    %v2052 = vpop.f32.mrb[0].mxu0
    %v2053 = vadd.f32 %v2012, %v2052
    %v2054 = vpop.f32.mrb[0].mxu0
    %v2055 = vpop.f32.mrb[0].mxu0
    %2056 = vdwg.mxu0
    %2057 = vmatprep.subr.bf16.mxu0 %v1453
    %2058 = vmatpush1.bf16.msra.mxu0 %v1452
    %2059 = vmatprep.subr.bf16.mxu0 %v1457
    %2060 = vmatpush1.bf16.msra.mxu0 %v1456
    %2061 = vmatprep.subr.bf16.mxu0 %v1461
    %2062 = vmatpush1.bf16.msra.mxu0 %v1460
    %2063 = vmatprep.subr.bf16.mxu0 %v1465
    %2064 = vmatpush1.bf16.msra.mxu0 %v1464
    %2065 = vmatprep.subr.bf16.mxu0 %v1469
    %2066 = vmatpush1.bf16.msra.mxu0 %v1468
    %2067 = vmatprep.subr.bf16.mxu0 %v1473
    %2068 = vmatpush1.bf16.msra.mxu0 %v1472
    %2069 = vmatprep.subr.bf16.mxu0 %v1477
    %2070 = vmatpush1.bf16.msra.mxu0 %v1476
    %2071 = vmatprep.subr.bf16.mxu0 %v1481
    %2072 = vmatpush1.bf16.msra.mxu0 %v1480
    %2073 = vmatprep.subr.bf16.mxu0 %v1485
    %2074 = vmatpush1.bf16.msra.mxu0 %v1484
    %2075 = vmatprep.subr.bf16.mxu0 %v1489
    %2076 = vmatpush1.bf16.msra.mxu0 %v1488
    %2077 = vmatprep.subr.bf16.mxu0 %v1493
    %2078 = vmatpush1.bf16.msra.mxu0 %v1492
    %2079 = vmatprep.subr.bf16.mxu0 %v1497
    %2080 = vmatpush1.bf16.msra.mxu0 %v1496
    %2081 = vmatprep.subr.bf16.mxu0 %v1501
    %2082 = vmatpush1.bf16.msra.mxu0 %v1500
    %2083 = vmatprep.subr.bf16.mxu0 %v1505
    %2084 = vmatpush1.bf16.msra.mxu0 %v1504
    %2085 = vmatprep.subr.bf16.mxu0 %v1509
    %2086 = vmatpush1.bf16.msra.mxu0 %v1508
    %2087 = vmatprep.subr.bf16.mxu0 %v1513
    %2088 = vmatpush1.bf16.msra.mxu0 %v1512
    %2089 = vmatprep.mubr.bf16.mxu0 %v211
    %2090 = vmatmul.mubr.bf16.gmra.mrb[0].mxu0 %v210
    %v2091 = vpop.f32.mrb[0].mxu0
    %v2092 = vadd.f32 %v2051, %v2091
    %v2093 = vpop.f32.mrb[0].mxu0
    %v2094 = vadd.f32 %v2053, %v2093
    %v2095 = vpop.f32.mrb[0].mxu0
    %v2096 = vpop.f32.mrb[0].mxu0
    %2097 = vdwg.mxu0
    %v2098 = vmax.f32 %v1928, 0.0
    %v2099 = vmax.f32 %v1930, 0.0
    %v2100 = vmax.f32 %v2092, 0.0
    %v2101 = vmax.f32 %v2094, 0.0
    %v2102 = vpack.c.bf16 %v2098, %v2098
    %v2103 = vpack.c.bf16 %v2099, %v2099
    %v2104 = vpack.c.bf16 %v2100, %v2100
    %v2105 = vpack.c.bf16 %v2101, %v2101
    %v2106 = vld [vmem:[%s5] sm:$0xf]
    %v2107 = vld [vmem:[%s5 + $0x4] sm:$0xf]
    %v2108 = vld [vmem:[%s5 + $0x8] sm:$0xf]
    %v2109 = vld [vmem:[%s5 + $0xc] sm:$0xf]
    %v2110 = vld [vmem:[%s5 + $0x10] sm:$0xf]
    %v2111 = vld [vmem:[%s5 + $0x14] sm:$0xf]
    %v2112 = vld [vmem:[%s5 + $0x18] sm:$0xf]
    %v2113 = vld [vmem:[%s5 + $0x1c] sm:$0xf]
    %v2114 = vld [vmem:[%s5 + $0x20] sm:$0xf]
    %v2115 = vld [vmem:[%s5 + $0x24] sm:$0xf]
    %v2116 = vld [vmem:[%s5 + $0x28] sm:$0xf]
    %v2117 = vld [vmem:[%s5 + $0x2c] sm:$0xf]
    %v2118 = vld [vmem:[%s5 + $0x30] sm:$0xf]
    %v2119 = vld [vmem:[%s5 + $0x34] sm:$0xf]
    %v2120 = vld [vmem:[%s5 + $0x38] sm:$0xf]
    %v2121 = vld [vmem:[%s5 + $0x3c] sm:$0xf]
    %v2122 = vld [vmem:[%s5 + $0x40] sm:$0xf]
    %v2123 = vld [vmem:[%s5 + $0x44] sm:$0xf]
    %v2124 = vld [vmem:[%s5 + $0x48] sm:$0xf]
    %v2125 = vld [vmem:[%s5 + $0x4c] sm:$0xf]
    %v2126 = vld [vmem:[%s5 + $0x50] sm:$0xf]
    %v2127 = vld [vmem:[%s5 + $0x54] sm:$0xf]
    %v2128 = vld [vmem:[%s5 + $0x58] sm:$0xf]
    %v2129 = vld [vmem:[%s5 + $0x5c] sm:$0xf]
    %v2130 = vld [vmem:[%s5 + $0x60] sm:$0xf]
    %v2131 = vld [vmem:[%s5 + $0x64] sm:$0xf]
    %v2132 = vld [vmem:[%s5 + $0x68] sm:$0xf]
    %v2133 = vld [vmem:[%s5 + $0x6c] sm:$0xf]
    %v2134 = vld [vmem:[%s5 + $0x70] sm:$0xf]
    %v2135 = vld [vmem:[%s5 + $0x74] sm:$0xf]
    %v2136 = vld [vmem:[%s5 + $0x78] sm:$0xf]
    %v2137 = vld [vmem:[%s5 + $0x7c] sm:$0xf]
    %v2138 = vld [vmem:[%s5 + $0x80] sm:$0xf]
    %v2139 = vld [vmem:[%s5 + $0x84] sm:$0xf]
    %v2140 = vld [vmem:[%s5 + $0x88] sm:$0xf]
    %v2141 = vld [vmem:[%s5 + $0x8c] sm:$0xf]
    %v2142 = vld [vmem:[%s5 + $0x90] sm:$0xf]
    %v2143 = vld [vmem:[%s5 + $0x94] sm:$0xf]
    %v2144 = vld [vmem:[%s5 + $0x98] sm:$0xf]
    %v2145 = vld [vmem:[%s5 + $0x9c] sm:$0xf]
    %v2146 = vld [vmem:[%s5 + $0xa0] sm:$0xf]
    %v2147 = vld [vmem:[%s5 + $0xa4] sm:$0xf]
    %v2148 = vld [vmem:[%s5 + $0xa8] sm:$0xf]
    %v2149 = vld [vmem:[%s5 + $0xac] sm:$0xf]
    %v2150 = vld [vmem:[%s5 + $0xb0] sm:$0xf]
    %v2151 = vld [vmem:[%s5 + $0xb4] sm:$0xf]
    %v2152 = vld [vmem:[%s5 + $0xb8] sm:$0xf]
    %v2153 = vld [vmem:[%s5 + $0xbc] sm:$0xf]
    %v2154 = vld [vmem:[%s5 + $0xc0] sm:$0xf]
    %v2155 = vld [vmem:[%s5 + $0xc4] sm:$0xf]
    %v2156 = vld [vmem:[%s5 + $0xc8] sm:$0xf]
    %v2157 = vld [vmem:[%s5 + $0xcc] sm:$0xf]
    %v2158 = vld [vmem:[%s5 + $0xd0] sm:$0xf]
    %v2159 = vld [vmem:[%s5 + $0xd4] sm:$0xf]
    %v2160 = vld [vmem:[%s5 + $0xd8] sm:$0xf]
    %v2161 = vld [vmem:[%s5 + $0xdc] sm:$0xf]
    %v2162 = vld [vmem:[%s5 + $0xe0] sm:$0xf]
    %v2163 = vld [vmem:[%s5 + $0xe4] sm:$0xf]
    %v2164 = vld [vmem:[%s5 + $0xe8] sm:$0xf]
    %v2165 = vld [vmem:[%s5 + $0xec] sm:$0xf]
    %v2166 = vld [vmem:[%s5 + $0xf0] sm:$0xf]
    %v2167 = vld [vmem:[%s5 + $0xf4] sm:$0xf]
    %v2168 = vld [vmem:[%s5 + $0xf8] sm:$0xf]
    %v2169 = vld [vmem:[%s5 + $0xfc] sm:$0xf]
    %v2170 = vld [vmem:[%s6] sm:$0x1]
    %v2172 = vlaneseq
    %v2173 = vshrl.u32 %v2172, 7
    %v2174 = vsub.s32 0, %v2173
    %v2175 = vrot.slane %v2170, %v2174
    %v2241 = vunpack.c.l.b16 %v2106
    %v2242 = vunpack.c.l.b16 %v2107
    %v2243 = vunpack.c.l.b16 %v2108
    %v2244 = vunpack.c.l.b16 %v2109
    %v2245 = vunpack.c.l.b16 %v2110
    %v2246 = vunpack.c.l.b16 %v2111
    %v2247 = vunpack.c.l.b16 %v2112
    %v2248 = vunpack.c.l.b16 %v2113
    %v2249 = vunpack.c.l.b16 %v2114
    %v2250 = vunpack.c.l.b16 %v2115
    %v2251 = vunpack.c.l.b16 %v2116
    %v2252 = vunpack.c.l.b16 %v2117
    %v2253 = vunpack.c.l.b16 %v2118
    %v2254 = vunpack.c.l.b16 %v2119
    %v2255 = vunpack.c.l.b16 %v2120
    %v2256 = vunpack.c.l.b16 %v2121
    %v2257 = vunpack.c.l.b16 %v2122
    %v2258 = vunpack.c.l.b16 %v2123
    %v2259 = vunpack.c.l.b16 %v2124
    %v2260 = vunpack.c.l.b16 %v2125
    %v2261 = vunpack.c.l.b16 %v2126
    %v2262 = vunpack.c.l.b16 %v2127
    %v2263 = vunpack.c.l.b16 %v2128
    %v2264 = vunpack.c.l.b16 %v2129
    %v2265 = vunpack.c.l.b16 %v2130
    %v2266 = vunpack.c.l.b16 %v2131
    %v2267 = vunpack.c.l.b16 %v2132
    %v2268 = vunpack.c.l.b16 %v2133
    %v2269 = vunpack.c.l.b16 %v2134
    %v2270 = vunpack.c.l.b16 %v2135
    %v2271 = vunpack.c.l.b16 %v2136
    %v2272 = vunpack.c.l.b16 %v2137
    %v2273 = vunpack.c.l.b16 %v2138
    %v2274 = vunpack.c.l.b16 %v2139
    %v2275 = vunpack.c.l.b16 %v2140
    %v2276 = vunpack.c.l.b16 %v2141
    %v2277 = vunpack.c.l.b16 %v2142
    %v2278 = vunpack.c.l.b16 %v2143
    %v2279 = vunpack.c.l.b16 %v2144
    %v2280 = vunpack.c.l.b16 %v2145
    %v2281 = vunpack.c.l.b16 %v2146
    %v2282 = vunpack.c.l.b16 %v2147
    %v2283 = vunpack.c.l.b16 %v2148
    %v2284 = vunpack.c.l.b16 %v2149
    %v2285 = vunpack.c.l.b16 %v2150
    %v2286 = vunpack.c.l.b16 %v2151
    %v2287 = vunpack.c.l.b16 %v2152
    %v2288 = vunpack.c.l.b16 %v2153
    %v2289 = vunpack.c.l.b16 %v2154
    %v2290 = vunpack.c.l.b16 %v2155
    %v2291 = vunpack.c.l.b16 %v2156
    %v2292 = vunpack.c.l.b16 %v2157
    %v2293 = vunpack.c.l.b16 %v2158
    %v2294 = vunpack.c.l.b16 %v2159
    %v2295 = vunpack.c.l.b16 %v2160
    %v2296 = vunpack.c.l.b16 %v2161
    %v2297 = vunpack.c.l.b16 %v2162
    %v2298 = vunpack.c.l.b16 %v2163
    %v2299 = vunpack.c.l.b16 %v2164
    %v2300 = vunpack.c.l.b16 %v2165
    %v2301 = vunpack.c.l.b16 %v2166
    %v2302 = vunpack.c.l.b16 %v2167
    %v2303 = vunpack.c.l.b16 %v2168
    %v2304 = vunpack.c.l.b16 %v2169
    %v2305 = vpack.c.b16 %v2242, %v2241
    %v2306 = vpack.c.b16 %v2244, %v2243
    %v2307 = vpack.c.b16 %v2246, %v2245
    %v2308 = vpack.c.b16 %v2248, %v2247
    %v2309 = vpack.c.b16 %v2250, %v2249
    %v2310 = vpack.c.b16 %v2252, %v2251
    %v2311 = vpack.c.b16 %v2254, %v2253
    %v2312 = vpack.c.b16 %v2256, %v2255
    %v2313 = vpack.c.b16 %v2258, %v2257
    %v2314 = vpack.c.b16 %v2260, %v2259
    %v2315 = vpack.c.b16 %v2262, %v2261
    %v2316 = vpack.c.b16 %v2264, %v2263
    %v2317 = vpack.c.b16 %v2266, %v2265
    %v2318 = vpack.c.b16 %v2268, %v2267
    %v2319 = vpack.c.b16 %v2270, %v2269
    %v2320 = vpack.c.b16 %v2272, %v2271
    %v2321 = vpack.c.b16 %v2274, %v2273
    %v2322 = vpack.c.b16 %v2276, %v2275
    %v2323 = vpack.c.b16 %v2278, %v2277
    %v2324 = vpack.c.b16 %v2280, %v2279
    %v2325 = vpack.c.b16 %v2282, %v2281
    %v2326 = vpack.c.b16 %v2284, %v2283
    %v2327 = vpack.c.b16 %v2286, %v2285
    %v2328 = vpack.c.b16 %v2288, %v2287
    %v2329 = vpack.c.b16 %v2290, %v2289
    %v2330 = vpack.c.b16 %v2292, %v2291
    %v2331 = vpack.c.b16 %v2294, %v2293
    %v2332 = vpack.c.b16 %v2296, %v2295
    %v2333 = vpack.c.b16 %v2298, %v2297
    %v2334 = vpack.c.b16 %v2300, %v2299
    %v2335 = vpack.c.b16 %v2302, %v2301
    %v2336 = vpack.c.b16 %v2304, %v2303
    %2369 = vmatprep.subr.bf16.mxu0 0
    %2370 = vmatpush1.bf16.msra.mxu0 %v2305
    %2371 = vmatprep.subr.bf16.mxu0 0
    %2372 = vmatpush1.bf16.msra.mxu0 %v2306
    %2373 = vmatprep.subr.bf16.mxu0 0
    %2374 = vmatpush1.bf16.msra.mxu0 %v2307
    %2375 = vmatprep.subr.bf16.mxu0 0
    %2376 = vmatpush1.bf16.msra.mxu0 %v2308
    %2377 = vmatprep.subr.bf16.mxu0 0
    %2378 = vmatpush1.bf16.msra.mxu0 %v2309
    %2379 = vmatprep.subr.bf16.mxu0 0
    %2380 = vmatpush1.bf16.msra.mxu0 %v2310
    %2381 = vmatprep.subr.bf16.mxu0 0
    %2382 = vmatpush1.bf16.msra.mxu0 %v2311
    %2383 = vmatprep.subr.bf16.mxu0 0
    %2384 = vmatpush1.bf16.msra.mxu0 %v2312
    %2385 = vmatprep.subr.bf16.mxu0 0
    %2386 = vmatpush1.bf16.msra.mxu0 %v2313
    %2387 = vmatprep.subr.bf16.mxu0 0
    %2388 = vmatpush1.bf16.msra.mxu0 %v2314
    %2389 = vmatprep.subr.bf16.mxu0 0
    %2390 = vmatpush1.bf16.msra.mxu0 %v2315
    %2391 = vmatprep.subr.bf16.mxu0 0
    %2392 = vmatpush1.bf16.msra.mxu0 %v2316
    %2393 = vmatprep.subr.bf16.mxu0 0
    %2394 = vmatpush1.bf16.msra.mxu0 %v2317
    %2395 = vmatprep.subr.bf16.mxu0 0
    %2396 = vmatpush1.bf16.msra.mxu0 %v2318
    %2397 = vmatprep.subr.bf16.mxu0 0
    %2398 = vmatpush1.bf16.msra.mxu0 %v2319
    %2399 = vmatprep.subr.bf16.mxu0 0
    %2400 = vmatpush1.bf16.msra.mxu0 %v2320
    %2401 = vmatprep.mubr.bf16.mxu0 %v2103
    %2402 = vmatmul.mubr.bf16.gmra.mrb[0].mxu0 %v2102
    %v2403 = vpop.f32.mrb[0].mxu0
    %v2404 = vadd.f32 %v2175, %v2403
    %v2405 = vpop.f32.mrb[0].mxu0
    %v2406 = vpop.f32.mrb[0].mxu0
    %v2407 = vpop.f32.mrb[0].mxu0
    %2408 = vdwg.mxu0
    %2409 = vmatprep.subr.bf16.mxu0 0
    %2410 = vmatpush1.bf16.msra.mxu0 %v2321
    %2411 = vmatprep.subr.bf16.mxu0 0
    %2412 = vmatpush1.bf16.msra.mxu0 %v2322
    %2413 = vmatprep.subr.bf16.mxu0 0
    %2414 = vmatpush1.bf16.msra.mxu0 %v2323
    %2415 = vmatprep.subr.bf16.mxu0 0
    %2416 = vmatpush1.bf16.msra.mxu0 %v2324
    %2417 = vmatprep.subr.bf16.mxu0 0
    %2418 = vmatpush1.bf16.msra.mxu0 %v2325
    %2419 = vmatprep.subr.bf16.mxu0 0
    %2420 = vmatpush1.bf16.msra.mxu0 %v2326
    %2421 = vmatprep.subr.bf16.mxu0 0
    %2422 = vmatpush1.bf16.msra.mxu0 %v2327
    %2423 = vmatprep.subr.bf16.mxu0 0
    %2424 = vmatpush1.bf16.msra.mxu0 %v2328
    %2425 = vmatprep.subr.bf16.mxu0 0
    %2426 = vmatpush1.bf16.msra.mxu0 %v2329
    %2427 = vmatprep.subr.bf16.mxu0 0
    %2428 = vmatpush1.bf16.msra.mxu0 %v2330
    %2429 = vmatprep.subr.bf16.mxu0 0
    %2430 = vmatpush1.bf16.msra.mxu0 %v2331
    %2431 = vmatprep.subr.bf16.mxu0 0
    %2432 = vmatpush1.bf16.msra.mxu0 %v2332
    %2433 = vmatprep.subr.bf16.mxu0 0
    %2434 = vmatpush1.bf16.msra.mxu0 %v2333
    %2435 = vmatprep.subr.bf16.mxu0 0
    %2436 = vmatpush1.bf16.msra.mxu0 %v2334
    %2437 = vmatprep.subr.bf16.mxu0 0
    %2438 = vmatpush1.bf16.msra.mxu0 %v2335
    %2439 = vmatprep.subr.bf16.mxu0 0
    %2440 = vmatpush1.bf16.msra.mxu0 %v2336
    %2441 = vmatprep.mubr.bf16.mxu0 %v2105
    %2442 = vmatmul.mubr.bf16.gmra.mrb[0].mxu0 %v2104
    %v2443 = vpop.f32.mrb[0].mxu0
    %v2444 = vadd.f32 %v2404, %v2443
    %v2445 = vpop.f32.mrb[0].mxu0
    %v2446 = vpop.f32.mrb[0].mxu0
    %v2447 = vpop.f32.mrb[0].mxu0
    %2448 = vdwg.mxu0
    %v2449 = vmax.f32 %v2444, 0.0
    %v2450 = vpack.c.bf16 %v2449, %v2449
    %v2451 = vld [vmem:[%s7] sm:$0xf]
    %v2452 = vld [vmem:[%s7 + $0x4] sm:$0xf]
    %v2453 = vld [vmem:[%s7 + $0x8] sm:$0xf]
    %v2454 = vld [vmem:[%s7 + $0xc] sm:$0xf]
    %v2455 = vld [vmem:[%s7 + $0x10] sm:$0xf]
    %v2456 = vld [vmem:[%s7 + $0x14] sm:$0xf]
    %v2457 = vld [vmem:[%s7 + $0x18] sm:$0xf]
    %v2458 = vld [vmem:[%s7 + $0x1c] sm:$0xf]
    %v2459 = vld [vmem:[%s7 + $0x20] sm:$0xf]
    %v2460 = vld [vmem:[%s7 + $0x24] sm:$0xf]
    %v2461 = vld [vmem:[%s7 + $0x28] sm:$0xf]
    %v2462 = vld [vmem:[%s7 + $0x2c] sm:$0xf]
    %v2463 = vld [vmem:[%s7 + $0x30] sm:$0xf]
    %v2464 = vld [vmem:[%s7 + $0x34] sm:$0xf]
    %v2465 = vld [vmem:[%s7 + $0x38] sm:$0xf]
    %v2466 = vld [vmem:[%s7 + $0x3c] sm:$0xf]
    %v2467 = vld [vmem:[%s8] sm:$0x1]
    %v2469 = vlaneseq
    %v2470 = vshrl.u32 %v2469, 7
    %v2471 = vsub.s32 0, %v2470
    %v2472 = vrot.slane %v2467, %v2471
    %v2490 = vunpack.c.l.b16 %v2451
    %v2491 = vunpack.c.l.b16 %v2452
    %v2492 = vunpack.c.l.b16 %v2453
    %v2493 = vunpack.c.l.b16 %v2454
    %v2494 = vunpack.c.l.b16 %v2455
    %v2495 = vunpack.c.l.b16 %v2456
    %v2496 = vunpack.c.l.b16 %v2457
    %v2497 = vunpack.c.l.b16 %v2458
    %v2498 = vunpack.c.l.b16 %v2459
    %v2499 = vunpack.c.l.b16 %v2460
    %v2500 = vunpack.c.l.b16 %v2461
    %v2501 = vunpack.c.l.b16 %v2462
    %v2502 = vunpack.c.l.b16 %v2463
    %v2503 = vunpack.c.l.b16 %v2464
    %v2504 = vunpack.c.l.b16 %v2465
    %v2505 = vunpack.c.l.b16 %v2466
    %v2506 = vpack.c.b16 %v2491, %v2490
    %v2507 = vpack.c.b16 %v2493, %v2492
    %v2508 = vpack.c.b16 %v2495, %v2494
    %v2509 = vpack.c.b16 %v2497, %v2496
    %v2510 = vpack.c.b16 %v2499, %v2498
    %v2511 = vpack.c.b16 %v2501, %v2500
    %v2512 = vpack.c.b16 %v2503, %v2502
    %v2513 = vpack.c.b16 %v2505, %v2504
    %2522 = vmatprep.subr.bf16.mxu0 0
    %2523 = vmatpush1.bf16.msra.mxu0 %v2506
    %2524 = vmatprep.subr.bf16.mxu0 0
    %2525 = vmatpush1.bf16.msra.mxu0 %v2507
    %2526 = vmatprep.subr.bf16.mxu0 0
    %2527 = vmatpush1.bf16.msra.mxu0 %v2508
    %2528 = vmatprep.subr.bf16.mxu0 0
    %2529 = vmatpush1.bf16.msra.mxu0 %v2509
    %2530 = vmatprep.subr.bf16.mxu0 0
    %2531 = vmatpush1.bf16.msra.mxu0 %v2510
    %2532 = vmatprep.subr.bf16.mxu0 0
    %2533 = vmatpush1.bf16.msra.mxu0 %v2511
    %2534 = vmatprep.subr.bf16.mxu0 0
    %2535 = vmatpush1.bf16.msra.mxu0 %v2512
    %2536 = vmatprep.subr.bf16.mxu0 0
    %2537 = vmatpush1.bf16.msra.mxu0 %v2513
    %2538 = vmatprep.subr.bf16.mxu0 0
    %2539 = vmatpush1.bf16.msra.mxu0 0
    %2540 = vmatprep.subr.bf16.mxu0 0
    %2541 = vmatpush1.bf16.msra.mxu0 0
    %2542 = vmatprep.subr.bf16.mxu0 0
    %2543 = vmatpush1.bf16.msra.mxu0 0
    %2544 = vmatprep.subr.bf16.mxu0 0
    %2545 = vmatpush1.bf16.msra.mxu0 0
    %2546 = vmatprep.subr.bf16.mxu0 0
    %2547 = vmatpush1.bf16.msra.mxu0 0
    %2548 = vmatprep.subr.bf16.mxu0 0
    %2549 = vmatpush1.bf16.msra.mxu0 0
    %2550 = vmatprep.subr.bf16.mxu0 0
    %2551 = vmatpush1.bf16.msra.mxu0 0
    %2552 = vmatprep.subr.bf16.mxu0 0
    %2553 = vmatpush1.bf16.msra.mxu0 0
    %2554 = vmatprep.mubr.bf16.mxu0 0
    %2555 = vmatmul.mubr.bf16.gmra.mrb[0].mxu0 %v2450
    %v2556 = vpop.f32.mrb[0].mxu0
    %v2557 = vadd.f32 %v2472, %v2556
    %v2558 = vpop.f32.mrb[0].mxu0
    %v2559 = vpop.f32.mrb[0].mxu0
    %v2560 = vpop.f32.mrb[0].mxu0
    %2561 = vdwg.mxu0
    %vm2562 = vcmask 64512
    %2563 = vst.msk [vmem:[#allocation5] sm:$0xff] %vm2562, %v2557
    // Predicated region
    $region42: #{landmarks_forward.1} parent=1 // pred_check
      _
    $region43: #{landmarks_forward.1} parent=1 // pred_check_branch
      %2565 = sbr.rel (0) target = $region45
    $region44: #{landmarks_forward.1} parent=1 // pred_region
      %s2567 = ssub.s32 128, 128
      %2568 = vsyncadd [#allocation4], %s2567
      %s2570 = sshll.u32 [#allocation5], 4
      %s2571 = int_to_ptr.vmem [resolvable:$true] %s2570
      %2573 = dma.vmem_to_hbm [thread:$0]  %s2571, 128, %s9, [#allocation4]
    $region45: #{landmarks_forward.1} parent=1 // pred_fallthru
      _
    // Predicated region
    $region46: #{landmarks_forward.1} parent=1 // pred_check
      _
    $region47: #{landmarks_forward.1} parent=1 // pred_check_branch
      %2575 = sbr.rel (0) target = $region49
    $region48: #{landmarks_forward.1} parent=1 // pred_region
      %2576 = dma.done [#allocation4], 128
    $region49: #{landmarks_forward.1} parent=1 // pred_fallthru
      _
    %2577 = vsyncpa [#allocation3], 1
    %2578 = vsyncpa [#allocation4], 1

</llo_original>
